<compile_context>
chip_gen: v7x
topology: tpu7x:2x2x1
jax: 0.10.0
libtpu: 0.0.40
codegen_flags: <defaults>
</compile_context>

<pallas_src>
import functools

import jax
import jax.numpy as jnp
from jax.experimental import pallas as pl
from jax.experimental.pallas import tpu as pltpu

_EPS = 1e-5
_STAT_ROWS = 8  # rows 0 (sum) and 1 (sum of squares) used; 8 for sublane alignment

_PARAM_ORDER = (
    "conv_w", "conv_b", "enc_bn_g", "enc_bn_b",
    "proj_w1", "proj_b1", "proj_bn_g", "proj_bn_b", "proj_w2", "proj_b2",
    "pred_w1", "pred_b1", "pred_bn_g", "pred_bn_b", "pred_w2", "pred_b2",
)


# ----------------------------- fused Pallas kernel ------------------------------

def _byol_fwd_kernel(p_ref,
                     w_ref, b_ref, eg_ref, ebeta_ref,
                     pw1_ref, pb1_ref, pg_ref, pbeta_ref, pw2_ref, pb2_ref,
                     qw1_ref, qb1_ref, qg_ref, qbeta_ref, qw2_ref, qb2_ref,
                     h_ref, z_ref, pred_ref,
                     act_ref, stats_ref,
                     *, batch, hw, tile_m):
    """Whole Online forward: conv + BN + ReLU + GAP + projector + predictor."""
    i = pl.program_id(0)
    n = pl.num_programs(0)

    @pl.when(i == 0)
    def _():
        stats_ref[...] = jnp.zeros_like(stats_ref)

    # ---- conv-as-matmul + bias for this M-tile; stash activation in VMEM ----
    acc = jnp.dot(p_ref[...], w_ref[...], preferred_element_type=jnp.float32)
    acc = acc + b_ref[...]
    start = pl.multiple_of(i * tile_m, tile_m)
    act_ref[pl.ds(start, tile_m), :] = acc

    # ---- accumulate per-channel sum / sum-of-squares for BatchNorm2d stats ----
    stats_ref[0:1, :] += jnp.sum(acc, axis=0, keepdims=True)
    stats_ref[1:2, :] += jnp.sum(acc * acc, axis=0, keepdims=True)

    # ---- finalize on the last tile: BN + ReLU + GAP + projector + predictor ----
    @pl.when(i == n - 1)
    def _():
        inv_m = 1.0 / float(batch * hw)
        mean = stats_ref[0:1, :] * inv_m
        var = stats_ref[1:2, :] * inv_m - mean * mean
        inv_std = jax.lax.rsqrt(var + _EPS)
        scale = inv_std * eg_ref[...]            # (1, F_pad)
        shift = ebeta_ref[...] - mean * scale    # (1, F_pad)

        inv_hw = 1.0 / float(hw)
        # static unrolled loop over the (small) batch; all slices are static
        for b in range(batch):
            xb = act_ref[b * hw:(b + 1) * hw, :]             # (hw, F_pad)
            yb = jnp.maximum(xb * scale + shift, 0.0)        # BN + ReLU
            h_ref[b:b + 1, :] = jnp.sum(yb, axis=0, keepdims=True) * inv_hw

        h = h_ref[...]                                       # (batch, F_pad)

        def linear_bn_relu_linear(x, w1, b1, g, beta, w2, b2):
            t = jnp.dot(x, w1, preferred_element_type=jnp.float32) + b1
            mu = jnp.mean(t, axis=0, keepdims=True)
            v = jnp.mean(t * t, axis=0, keepdims=True) - mu * mu
            y = jnp.maximum((t - mu) * jax.lax.rsqrt(v + _EPS) * g + beta, 0.0)
            return jnp.dot(y, w2, preferred_element_type=jnp.float32) + b2

        z = linear_bn_relu_linear(h, pw1_ref[...], pb1_ref[...],
                                  pg_ref[...], pbeta_ref[...],
                                  pw2_ref[...], pb2_ref[...])
        z_ref[...] = z
        pred_ref[...] = linear_bn_relu_linear(z, qw1_ref[...], qb1_ref[...],
                                              qg_ref[...], qbeta_ref[...],
                                              qw2_ref[...], qb2_ref[...])


# ----------------------------- kernel wrapper ------------------------------

def _round_up(x, m):
    return ((x + m - 1) // m) * m


def _largest_divisor_tile(n, cap):
    """Largest divisor of n that is <= cap and a multiple of 8 (falls back to n)."""
    for t in range(min(cap, n), 7, -1):
        if n % t == 0 and t % 8 == 0:
            return t
    return n


def byol_forward_pallas(patches_bf16, padded, *, batch, hw, tile_m):
    M, K_pad = patches_bf16.shape
    F_pad = padded["conv_w"].shape[1]
    P_pad = padded["pred_w2"].shape[1]
    assert M == batch * hw and M % tile_m == 0

    kernel = functools.partial(_byol_fwd_kernel, batch=batch, hw=hw, tile_m=tile_m)

    def full_spec(shape):
        return pl.BlockSpec(shape, lambda i: (0,) * len(shape))

    param_args = [padded[k] for k in _PARAM_ORDER]

    return pl.pallas_call(
        kernel,
        out_shape=(jax.ShapeDtypeStruct((batch, F_pad), jnp.float32),   # h
                   jax.ShapeDtypeStruct((batch, P_pad), jnp.float32),   # z
                   jax.ShapeDtypeStruct((batch, P_pad), jnp.float32)),  # pred
        grid=(M // tile_m,),
        in_specs=[pl.BlockSpec((tile_m, K_pad), lambda i: (i, 0))]      # streamed patches
                 + [full_spec(a.shape) for a in param_args],            # resident weights
        out_specs=(full_spec((batch, F_pad)),
                   full_spec((batch, P_pad)),
                   full_spec((batch, P_pad))),
        scratch_shapes=[pltpu.VMEM((M, F_pad), jnp.float32),            # conv activation
                        pltpu.VMEM((_STAT_ROWS, F_pad), jnp.float32)],  # BN stats
        compiler_params=pltpu.CompilerParams(dimension_semantics=("arbitrary",)),
    )(patches_bf16, *param_args)


# ----------------------------- glue (JAX) ------------------------------

def im2col_3x3(x_nhwc):
    """3x3, stride 1, padding 1 patches. Returns [B*H*W, 9*C_in]."""
    B, H, W, C = x_nhwc.shape
    xp = jnp.pad(x_nhwc, ((0, 0), (1, 1), (1, 1), (0, 0)))
    patches = []
    for dy in range(3):
        for dx in range(3):
            patches.append(xp[:, dy:dy + H, dx:dx + W, :])
    return jnp.concatenate(patches, axis=-1).reshape(B * H * W, 9 * C)


def init_params(key, c_in, n_features, projection_dim):
    ks = jax.random.split(key, 6)
    p = {}
    # encoder stand-in: conv3x3 (c_in -> n_features) + BN + ReLU + GAP
    p["conv_w"] = 0.1 * jax.random.normal(ks[0], (9 * c_in, n_features), jnp.float32)
    p["conv_b"] = jnp.zeros((n_features,), jnp.float32)
    p["enc_bn_g"] = jnp.ones((n_features,), jnp.float32)
    p["enc_bn_b"] = jnp.zeros((n_features,), jnp.float32)
    # projector: Linear(F,F) -> BN1d(F) -> ReLU -> Linear(F,P)
    p["proj_w1"] = 0.1 * jax.random.normal(ks[1], (n_features, n_features), jnp.float32)
    p["proj_b1"] = jnp.zeros((n_features,), jnp.float32)
    p["proj_bn_g"] = jnp.ones((n_features,), jnp.float32)
    p["proj_bn_b"] = jnp.zeros((n_features,), jnp.float32)
    p["proj_w2"] = 0.1 * jax.random.normal(ks[2], (n_features, projection_dim), jnp.float32)
    p["proj_b2"] = jnp.zeros((projection_dim,), jnp.float32)
    # predictor: Linear(P,P) -> BN1d(P) -> ReLU -> Linear(P,P)
    p["pred_w1"] = 0.1 * jax.random.normal(ks[3], (projection_dim, projection_dim), jnp.float32)
    p["pred_b1"] = jnp.zeros((projection_dim,), jnp.float32)
    p["pred_bn_g"] = jnp.ones((projection_dim,), jnp.float32)
    p["pred_bn_b"] = jnp.zeros((projection_dim,), jnp.float32)
    p["pred_w2"] = 0.1 * jax.random.normal(ks[4], (projection_dim, projection_dim), jnp.float32)
    p["pred_b2"] = jnp.zeros((projection_dim,), jnp.float32)
    return p


def pad_params(p, n_features, projection_dim):
    """Pad feature dims to lane-dense multiples of 128; encoder weight to bf16.

    Padded BN gammas are zero, so padded channels stay exactly zero through
    BN -> ReLU -> GAP -> the MLP head (padded weight rows/cols are zero too).
    """
    F_pad = _round_up(n_features, 128)
    P_pad = _round_up(projection_dim, 128)
    K = p["conv_w"].shape[0]
    K_pad = _round_up(K, 8)

    def pad2(a, r, c):
        return jnp.pad(a, ((0, r - a.shape[0]), (0, c - a.shape[1])))

    def row(a, c):
        return jnp.pad(a.reshape(1, -1), ((0, 0), (0, c - a.shape[0])))

    q = {}
    q["conv_w"] = pad2(p["conv_w"], K_pad, F_pad).astype(jnp.bfloat16)
    q["conv_b"] = row(p["conv_b"], F_pad)
    q["enc_bn_g"] = row(p["enc_bn_g"], F_pad)
    q["enc_bn_b"] = row(p["enc_bn_b"], F_pad)
    q["proj_w1"] = pad2(p["proj_w1"], F_pad, F_pad)
    q["proj_b1"] = row(p["proj_b1"], F_pad)
    q["proj_bn_g"] = row(p["proj_bn_g"], F_pad)
    q["proj_bn_b"] = row(p["proj_bn_b"], F_pad)
    q["proj_w2"] = pad2(p["proj_w2"], F_pad, P_pad)
    q["proj_b2"] = row(p["proj_b2"], P_pad)
    q["pred_w1"] = pad2(p["pred_w1"], P_pad, P_pad)
    q["pred_b1"] = row(p["pred_b1"], P_pad)
    q["pred_bn_g"] = row(p["pred_bn_g"], P_pad)
    q["pred_bn_b"] = row(p["pred_bn_b"], P_pad)
    q["pred_w2"] = pad2(p["pred_w2"], P_pad, P_pad)
    q["pred_b2"] = row(p["pred_b2"], P_pad)
    return q


def online_forward(padded, x_nchw, *, n_features, projection_dim):
    """Forward of Online (non-LBE branch): returns (h, z, pred)."""
    B, C, H, W = x_nchw.shape

    # ---- encoder front-end glue ----
    x_nhwc = jnp.transpose(x_nchw, (0, 2, 3, 1))          # NCHW -> NHWC (glue)
    patches = im2col_3x3(x_nhwc)                          # [M, 9*C]        (glue)
    M, K = patches.shape
    K_pad = padded["conv_w"].shape[0]
    if K_pad != K:
        patches = jnp.pad(patches, ((0, 0), (0, K_pad - K)))
    patches = patches.astype(jnp.bfloat16)                # bf16 feed for the MXU

    HW = H * W
    # Tile over M; cap kept conservative so double-buffered tiles + the VMEM
    # activation scratch fit v7x's smaller VMEM too.
    tile_m = _largest_divisor_tile(M, 256)

    h_pad, z_pad, pred_pad = byol_forward_pallas(
        patches, padded, batch=B, hw=HW, tile_m=tile_m)

    return (h_pad[:, :n_features],
            z_pad[:, :projection_dim],
            pred_pad[:, :projection_dim])


if __name__ == "__main__":
    # small shapes consistent with the module's forward:
    #   batch=2, 3-channel 16x16 images, n_features=32, projection_dim=16
    B, C, H, W = 2, 3, 16, 16
    n_features, projection_dim = 32, 16

    key = jax.random.PRNGKey(0)
    k_x, k_p = jax.random.split(key)
    x = jax.random.normal(k_x, (B, C, H, W), dtype=jnp.float32)
    params = init_params(k_p, C, n_features, projection_dim)
    padded = pad_params(params, n_features, projection_dim)

    fwd = jax.jit(functools.partial(online_forward,
                                    n_features=n_features,
                                    projection_dim=projection_dim))
    h, z, pred = fwd(padded, x)
    jax.block_until_ready((h, z, pred))

    assert h.shape == (B, n_features)
    assert z.shape == (B, projection_dim)
    assert pred.shape == (B, projection_dim)
    print("KERNEL_OK")
</pallas_src>

<mosaic_0001>
module attributes {stable_mosaic.version = 11 : i64} {
  func.func @_byol_fwd_kernel(%arg0: i32, %arg1: memref<256x32xbf16, #tpu.memory_space<vmem>>, %arg2: memref<32x128xbf16, #tpu.memory_space<vmem>>, %arg3: memref<1x128xf32, #tpu.memory_space<vmem>>, %arg4: memref<1x128xf32, #tpu.memory_space<vmem>>, %arg5: memref<1x128xf32, #tpu.memory_space<vmem>>, %arg6: memref<128x128xf32, #tpu.memory_space<vmem>>, %arg7: memref<1x128xf32, #tpu.memory_space<vmem>>, %arg8: memref<1x128xf32, #tpu.memory_space<vmem>>, %arg9: memref<1x128xf32, #tpu.memory_space<vmem>>, %arg10: memref<128x128xf32, #tpu.memory_space<vmem>>, %arg11: memref<1x128xf32, #tpu.memory_space<vmem>>, %arg12: memref<128x128xf32, #tpu.memory_space<vmem>>, %arg13: memref<1x128xf32, #tpu.memory_space<vmem>>, %arg14: memref<1x128xf32, #tpu.memory_space<vmem>>, %arg15: memref<1x128xf32, #tpu.memory_space<vmem>>, %arg16: memref<128x128xf32, #tpu.memory_space<vmem>>, %arg17: memref<1x128xf32, #tpu.memory_space<vmem>>, %arg18: memref<2x128xf32, #tpu.memory_space<vmem>>, %arg19: memref<2x128xf32, #tpu.memory_space<vmem>>, %arg20: memref<2x128xf32, #tpu.memory_space<vmem>>, %arg21: memref<512x128xf32, #tpu.memory_space<vmem>>, %arg22: memref<8x128xf32, #tpu.memory_space<vmem>>) attributes {dimension_semantics = [#tpu.dimension_semantics<arbitrary>], iteration_bounds = array<i64: 2>, scalar_prefetch = 0 : i64, scratch_operands = 2 : i64, tpu.core_type = #tpu.core_type<tc>, window_params = [{transform_indices = @transform_0, window_bounds = array<i64: 256, 32>}, {pipeline_mode = #tpu.pipeline_mode<synchronous>, transform_indices = @transform_1, window_bounds = array<i64: 32, 128>}, {pipeline_mode = #tpu.pipeline_mode<synchronous>, transform_indices = @transform_2, window_bounds = array<i64: 1, 128>}, {pipeline_mode = #tpu.pipeline_mode<synchronous>, transform_indices = @transform_3, window_bounds = array<i64: 1, 128>}, {pipeline_mode = #tpu.pipeline_mode<synchronous>, transform_indices = @transform_4, window_bounds = array<i64: 1, 128>}, {pipeline_mode = #tpu.pipeline_mode<synchronous>, transform_indices = @transform_5, window_bounds = array<i64: 128, 128>}, {pipeline_mode = #tpu.pipeline_mode<synchronous>, transform_indices = @transform_6, window_bounds = array<i64: 1, 128>}, {pipeline_mode = #tpu.pipeline_mode<synchronous>, transform_indices = @transform_7, window_bounds = array<i64: 1, 128>}, {pipeline_mode = #tpu.pipeline_mode<synchronous>, transform_indices = @transform_8, window_bounds = array<i64: 1, 128>}, {pipeline_mode = #tpu.pipeline_mode<synchronous>, transform_indices = @transform_9, window_bounds = array<i64: 128, 128>}, {pipeline_mode = #tpu.pipeline_mode<synchronous>, transform_indices = @transform_10, window_bounds = array<i64: 1, 128>}, {pipeline_mode = #tpu.pipeline_mode<synchronous>, transform_indices = @transform_11, window_bounds = array<i64: 128, 128>}, {pipeline_mode = #tpu.pipeline_mode<synchronous>, transform_indices = @transform_12, window_bounds = array<i64: 1, 128>}, {pipeline_mode = #tpu.pipeline_mode<synchronous>, transform_indices = @transform_13, window_bounds = array<i64: 1, 128>}, {pipeline_mode = #tpu.pipeline_mode<synchronous>, transform_indices = @transform_14, window_bounds = array<i64: 1, 128>}, {pipeline_mode = #tpu.pipeline_mode<synchronous>, transform_indices = @transform_15, window_bounds = array<i64: 128, 128>}, {pipeline_mode = #tpu.pipeline_mode<synchronous>, transform_indices = @transform_16, window_bounds = array<i64: 1, 128>}, {pipeline_mode = #tpu.pipeline_mode<synchronous>, transform_indices = @transform_17, window_bounds = array<i64: 2, 128>}, {pipeline_mode = #tpu.pipeline_mode<synchronous>, transform_indices = @transform_18, window_bounds = array<i64: 2, 128>}, {pipeline_mode = #tpu.pipeline_mode<synchronous>, transform_indices = @transform_19, window_bounds = array<i64: 2, 128>}]} {
    %c0_i32 = arith.constant 0 : i32
    %0 = arith.cmpi eq, %arg0, %c0_i32 : i32
    %1 = arith.extui %0 : i1 to i32
    %c0_i32_0 = arith.constant 0 : i32
    %2 = arith.cmpi ne, %1, %c0_i32_0 : i32
    scf.if %2 {
      %cst_17 = arith.constant 0.000000e+00 : f32
      %27 = vector.broadcast %cst_17 : f32 to vector<8x128xf32>
      %c0_18 = arith.constant 0 : index
      %c0_19 = arith.constant 0 : index
      %28 = vector.load %arg22[%c0_18, %c0_19] : memref<8x128xf32, #tpu.memory_space<vmem>>, vector<8x128xf32>
      tpu.vector_store %arg22[%c0_18, %c0_19], %27 {strides = array<i32>} : memref<8x128xf32, #tpu.memory_space<vmem>>, vector<8x128xf32>,
    } else {
    }
    %c0 = arith.constant 0 : index
    %c0_1 = arith.constant 0 : index
    %3 = vector.load %arg1[%c0, %c0_1] : memref<256x32xbf16, #tpu.memory_space<vmem>>, vector<256x32xbf16>
    %c0_2 = arith.constant 0 : index
    %c0_3 = arith.constant 0 : index
    %4 = vector.load %arg2[%c0_2, %c0_3] : memref<32x128xbf16, #tpu.memory_space<vmem>>, vector<32x128xbf16>
    %cst = arith.constant dense<0.000000e+00> : vector<256x128xf32>
    %5 = tpu.matmul %3, %4, %cst {dimension_numbers = #tpu.dot_dimension_numbers<[1], [0], [0], [1], [0, 0, 1, 1], [], []>} : vector<256x32xbf16>, vector<32x128xbf16>, vector<256x128xf32> -> vector<256x128xf32>
    %c0_4 = arith.constant 0 : index
    %c0_5 = arith.constant 0 : index
    %6 = vector.load %arg3[%c0_4, %c0_5] : memref<1x128xf32, #tpu.memory_space<vmem>>, vector<1x128xf32>
    %7 = vector.broadcast %6 : vector<1x128xf32> to vector<256x128xf32>
    %8 = arith.addf %5, %7 : vector<256x128xf32>
    %c256_i32 = arith.constant 256 : i32
    %9 = arith.muli %arg0, %c256_i32 : i32
    %10 = tpu.assume_multiple %9, 256 : i32
    %11 = arith.index_cast %10 : i32 to index
    %c0_6 = arith.constant 0 : index
    %12 = vector.load %arg21[%11, %c0_6] : memref<512x128xf32, #tpu.memory_space<vmem>>, vector<256x128xf32>
    tpu.vector_store %arg21[%11, %c0_6], %8 {strides = array<i32>} : memref<512x128xf32, #tpu.memory_space<vmem>>, vector<256x128xf32>,
    %c0_7 = arith.constant 0 : index
    %c0_8 = arith.constant 0 : index
    %13 = vector.load %arg22[%c0_7, %c0_8] : memref<8x128xf32, #tpu.memory_space<vmem>>, vector<1x128xf32>
    %cst_9 = arith.constant dense<0.000000e+00> : vector<128xf32>
    %14 = vector.multi_reduction <add>, %8, %cst_9 [0] : vector<256x128xf32> to vector<128xf32>
    %15 = vector.shape_cast %14 : vector<128xf32> to vector<1x128xf32>
    %16 = arith.addf %13, %15 : vector<1x128xf32>
    %c0_10 = arith.constant 0 : index
    %c0_11 = arith.constant 0 : index
    %17 = vector.load %arg22[%c0_10, %c0_11] : memref<8x128xf32, #tpu.memory_space<vmem>>, vector<1x128xf32>
    tpu.vector_store %arg22[%c0_10, %c0_11], %16 {strides = array<i32>} : memref<8x128xf32, #tpu.memory_space<vmem>>, vector<1x128xf32>,
    %c1 = arith.constant 1 : index
    %c0_12 = arith.constant 0 : index
    %18 = vector.load %arg22[%c1, %c0_12] : memref<8x128xf32, #tpu.memory_space<vmem>>, vector<1x128xf32>
    %19 = arith.mulf %8, %8 : vector<256x128xf32>
    %cst_13 = arith.constant dense<0.000000e+00> : vector<128xf32>
    %20 = vector.multi_reduction <add>, %19, %cst_13 [0] : vector<256x128xf32> to vector<128xf32>
    %21 = vector.shape_cast %20 : vector<128xf32> to vector<1x128xf32>
    %22 = arith.addf %18, %21 : vector<1x128xf32>
    %c1_14 = arith.constant 1 : index
    %c0_15 = arith.constant 0 : index
    %23 = vector.load %arg22[%c1_14, %c0_15] : memref<8x128xf32, #tpu.memory_space<vmem>>, vector<1x128xf32>
    tpu.vector_store %arg22[%c1_14, %c0_15], %22 {strides = array<i32>} : memref<8x128xf32, #tpu.memory_space<vmem>>, vector<1x128xf32>,
    %c1_i32 = arith.constant 1 : i32
    %24 = arith.cmpi eq, %arg0, %c1_i32 : i32
    %25 = arith.extui %24 : i1 to i32
    %c0_i32_16 = arith.constant 0 : i32
    %26 = arith.cmpi ne, %25, %c0_i32_16 : i32
    scf.if %26 {
      %c0_17 = arith.constant 0 : index
      %c0_18 = arith.constant 0 : index
      %27 = vector.load %arg22[%c0_17, %c0_18] : memref<8x128xf32, #tpu.memory_space<vmem>>, vector<1x128xf32>
      %cst_19 = arith.constant 0.001953125 : f32
      %28 = vector.broadcast %cst_19 : f32 to vector<1x128xf32>
      %29 = arith.mulf %27, %28 : vector<1x128xf32>
      %c1_20 = arith.constant 1 : index
      %c0_21 = arith.constant 0 : index
      %30 = vector.load %arg22[%c1_20, %c0_21] : memref<8x128xf32, #tpu.memory_space<vmem>>, vector<1x128xf32>
      %cst_22 = arith.constant 0.001953125 : f32
      %31 = vector.broadcast %cst_22 : f32 to vector<1x128xf32>
      %32 = arith.mulf %30, %31 : vector<1x128xf32>
      %33 = arith.mulf %29, %29 : vector<1x128xf32>
      %34 = arith.subf %32, %33 : vector<1x128xf32>
      %cst_23 = arith.constant 9.99999974E-6 : f32
      %35 = vector.broadcast %cst_23 : f32 to vector<1x128xf32>
      %36 = arith.addf %34, %35 : vector<1x128xf32>
      %37 = math.rsqrt %36 : vector<1x128xf32>
      %c0_24 = arith.constant 0 : index
      %c0_25 = arith.constant 0 : index
      %38 = vector.load %arg4[%c0_24, %c0_25] : memref<1x128xf32, #tpu.memory_space<vmem>>, vector<1x128xf32>
      %39 = arith.mulf %37, %38 : vector<1x128xf32>
      %c0_26 = arith.constant 0 : index
      %c0_27 = arith.constant 0 : index
      %40 = vector.load %arg5[%c0_26, %c0_27] : memref<1x128xf32, #tpu.memory_space<vmem>>, vector<1x128xf32>
      %41 = arith.mulf %29, %39 : vector<1x128xf32>
      %42 = arith.subf %40, %41 : vector<1x128xf32>
      %c0_28 = arith.constant 0 : index
      %c0_29 = arith.constant 0 : index
      %43 = vector.load %arg21[%c0_28, %c0_29] : memref<512x128xf32, #tpu.memory_space<vmem>>, vector<256x128xf32>
      %44 = vector.broadcast %39 : vector<1x128xf32> to vector<256x128xf32>
      %45 = arith.mulf %43, %44 : vector<256x128xf32>
      %46 = vector.broadcast %42 : vector<1x128xf32> to vector<256x128xf32>
      %47 = arith.addf %45, %46 : vector<256x128xf32>
      %cst_30 = arith.constant 0.000000e+00 : f32
      %48 = vector.broadcast %cst_30 : f32 to vector<256x128xf32>
      %49 = arith.maximumf %47, %48 : vector<256x128xf32>
      %cst_31 = arith.constant dense<0.000000e+00> : vector<128xf32>
      %50 = vector.multi_reduction <add>, %49, %cst_31 [0] : vector<256x128xf32> to vector<128xf32>
      %51 = vector.shape_cast %50 : vector<128xf32> to vector<1x128xf32>
      %cst_32 = arith.constant 3.906250e-03 : f32
      %52 = vector.broadcast %cst_32 : f32 to vector<1x128xf32>
      %53 = arith.mulf %51, %52 : vector<1x128xf32>
      %c0_33 = arith.constant 0 : index
      %c0_34 = arith.constant 0 : index
      %54 = vector.load %arg18[%c0_33, %c0_34] : memref<2x128xf32, #tpu.memory_space<vmem>>, vector<1x128xf32>
      tpu.vector_store %arg18[%c0_33, %c0_34], %53 {strides = array<i32>} : memref<2x128xf32, #tpu.memory_space<vmem>>, vector<1x128xf32>,
      %c256 = arith.constant 256 : index
      %c0_35 = arith.constant 0 : index
      %55 = vector.load %arg21[%c256, %c0_35] : memref<512x128xf32, #tpu.memory_space<vmem>>, vector<256x128xf32>
      %56 = vector.broadcast %39 : vector<1x128xf32> to vector<256x128xf32>
      %57 = arith.mulf %55, %56 : vector<256x128xf32>
      %58 = vector.broadcast %42 : vector<1x128xf32> to vector<256x128xf32>
      %59 = arith.addf %57, %58 : vector<256x128xf32>
      %cst_36 = arith.constant 0.000000e+00 : f32
      %60 = vector.broadcast %cst_36 : f32 to vector<256x128xf32>
      %61 = arith.maximumf %59, %60 : vector<256x128xf32>
      %cst_37 = arith.constant dense<0.000000e+00> : vector<128xf32>
      %62 = vector.multi_reduction <add>, %61, %cst_37 [0] : vector<256x128xf32> to vector<128xf32>
      %63 = vector.shape_cast %62 : vector<128xf32> to vector<1x128xf32>
      %cst_38 = arith.constant 3.906250e-03 : f32
      %64 = vector.broadcast %cst_38 : f32 to vector<1x128xf32>
      %65 = arith.mulf %63, %64 : vector<1x128xf32>
      %c1_39 = arith.constant 1 : index
      %c0_40 = arith.constant 0 : index
      %66 = vector.load %arg18[%c1_39, %c0_40] : memref<2x128xf32, #tpu.memory_space<vmem>>, vector<1x128xf32>
      tpu.vector_store %arg18[%c1_39, %c0_40], %65 {strides = array<i32>} : memref<2x128xf32, #tpu.memory_space<vmem>>, vector<1x128xf32>,
      %c0_41 = arith.constant 0 : index
      %c0_42 = arith.constant 0 : index
      %67 = vector.load %arg18[%c0_41, %c0_42] : memref<2x128xf32, #tpu.memory_space<vmem>>, vector<2x128xf32>
      %c0_43 = arith.constant 0 : index
      %c0_44 = arith.constant 0 : index
      %68 = vector.load %arg6[%c0_43, %c0_44] : memref<128x128xf32, #tpu.memory_space<vmem>>, vector<128x128xf32>
      %c0_45 = arith.constant 0 : index
      %c0_46 = arith.constant 0 : index
      %69 = vector.load %arg7[%c0_45, %c0_46] : memref<1x128xf32, #tpu.memory_space<vmem>>, vector<1x128xf32>
      %c0_47 = arith.constant 0 : index
      %c0_48 = arith.constant 0 : index
      %70 = vector.load %arg8[%c0_47, %c0_48] : memref<1x128xf32, #tpu.memory_space<vmem>>, vector<1x128xf32>
      %c0_49 = arith.constant 0 : index
      %c0_50 = arith.constant 0 : index
      %71 = vector.load %arg9[%c0_49, %c0_50] : memref<1x128xf32, #tpu.memory_space<vmem>>, vector<1x128xf32>
      %c0_51 = arith.constant 0 : index
      %c0_52 = arith.constant 0 : index
      %72 = vector.load %arg10[%c0_51, %c0_52] : memref<128x128xf32, #tpu.memory_space<vmem>>, vector<128x128xf32>
      %c0_53 = arith.constant 0 : index
      %c0_54 = arith.constant 0 : index
      %73 = vector.load %arg11[%c0_53, %c0_54] : memref<1x128xf32, #tpu.memory_space<vmem>>, vector<1x128xf32>
      %cst_55 = arith.constant dense<0.000000e+00> : vector<2x128xf32>
      %74 = tpu.matmul %67, %68, %cst_55 {dimension_numbers = #tpu.dot_dimension_numbers<[1], [0], [0], [1], [0, 0, 1, 1], [], []>} : vector<2x128xf32>, vector<128x128xf32>, vector<2x128xf32> -> vector<2x128xf32>
      %75 = vector.broadcast %69 : vector<1x128xf32> to vector<2x128xf32>
      %76 = arith.addf %74, %75 : vector<2x128xf32>
      %cst_56 = arith.constant dense<0.000000e+00> : vector<128xf32>
      %77 = vector.multi_reduction <add>, %76, %cst_56 [0] : vector<2x128xf32> to vector<128xf32>
      %78 = vector.shape_cast %77 : vector<128xf32> to vector<1x128xf32>
      %cst_57 = arith.constant 2.000000e+00 : f32
      %79 = vector.broadcast %cst_57 : f32 to vector<1x128xf32>
      %80 = arith.divf %78, %79 : vector<1x128xf32>
      %81 = arith.mulf %76, %76 : vector<2x128xf32>
      %cst_58 = arith.constant dense<0.000000e+00> : vector<128xf32>
      %82 = vector.multi_reduction <add>, %81, %cst_58 [0] : vector<2x128xf32> to vector<128xf32>
      %83 = vector.shape_cast %82 : vector<128xf32> to vector<1x128xf32>
      %cst_59 = arith.constant 2.000000e+00 : f32
      %84 = vector.broadcast %cst_59 : f32 to vector<1x128xf32>
      %85 = arith.divf %83, %84 : vector<1x128xf32>
      %86 = arith.mulf %80, %80 : vector<1x128xf32>
      %87 = arith.subf %85, %86 : vector<1x128xf32>
      %88 = vector.broadcast %80 : vector<1x128xf32> to vector<2x128xf32>
      %89 = arith.subf %76, %88 : vector<2x128xf32>
      %cst_60 = arith.constant 9.99999974E-6 : f32
      %90 = vector.broadcast %cst_60 : f32 to vector<1x128xf32>
      %91 = arith.addf %87, %90 : vector<1x128xf32>
      %92 = math.rsqrt %91 : vector<1x128xf32>
      %93 = vector.broadcast %92 : vector<1x128xf32> to vector<2x128xf32>
      %94 = arith.mulf %89, %93 : vector<2x128xf32>
      %95 = vector.broadcast %70 : vector<1x128xf32> to vector<2x128xf32>
      %96 = arith.mulf %94, %95 : vector<2x128xf32>
      %97 = vector.broadcast %71 : vector<1x128xf32> to vector<2x128xf32>
      %98 = arith.addf %96, %97 : vector<2x128xf32>
      %cst_61 = arith.constant 0.000000e+00 : f32
      %99 = vector.broadcast %cst_61 : f32 to vector<2x128xf32>
      %100 = arith.maximumf %98, %99 : vector<2x128xf32>
      %cst_62 = arith.constant dense<0.000000e+00> : vector<2x128xf32>
      %101 = tpu.matmul %100, %72, %cst_62 {dimension_numbers = #tpu.dot_dimension_numbers<[1], [0], [0], [1], [0, 0, 1, 1], [], []>} : vector<2x128xf32>, vector<128x128xf32>, vector<2x128xf32> -> vector<2x128xf32>
      %102 = vector.broadcast %73 : vector<1x128xf32> to vector<2x128xf32>
      %103 = arith.addf %101, %102 : vector<2x128xf32>
      %c0_63 = arith.constant 0 : index
      %c0_64 = arith.constant 0 : index
      %104 = vector.load %arg19[%c0_63, %c0_64] : memref<2x128xf32, #tpu.memory_space<vmem>>, vector<2x128xf32>
      tpu.vector_store %arg19[%c0_63, %c0_64], %103 {strides = array<i32>} : memref<2x128xf32, #tpu.memory_space<vmem>>, vector<2x128xf32>,
      %c0_65 = arith.constant 0 : index
      %c0_66 = arith.constant 0 : index
      %105 = vector.load %arg12[%c0_65, %c0_66] : memref<128x128xf32, #tpu.memory_space<vmem>>, vector<128x128xf32>
      %c0_67 = arith.constant 0 : index
      %c0_68 = arith.constant 0 : index
      %106 = vector.load %arg13[%c0_67, %c0_68] : memref<1x128xf32, #tpu.memory_space<vmem>>, vector<1x128xf32>
      %c0_69 = arith.constant 0 : index
      %c0_70 = arith.constant 0 : index
      %107 = vector.load %arg14[%c0_69, %c0_70] : memref<1x128xf32, #tpu.memory_space<vmem>>, vector<1x128xf32>
      %c0_71 = arith.constant 0 : index
      %c0_72 = arith.constant 0 : index
      %108 = vector.load %arg15[%c0_71, %c0_72] : memref<1x128xf32, #tpu.memory_space<vmem>>, vector<1x128xf32>
      %c0_73 = arith.constant 0 : index
      %c0_74 = arith.constant 0 : index
      %109 = vector.load %arg16[%c0_73, %c0_74] : memref<128x128xf32, #tpu.memory_space<vmem>>, vector<128x128xf32>
      %c0_75 = arith.constant 0 : index
      %c0_76 = arith.constant 0 : index
      %110 = vector.load %arg17[%c0_75, %c0_76] : memref<1x128xf32, #tpu.memory_space<vmem>>, vector<1x128xf32>
      %cst_77 = arith.constant dense<0.000000e+00> : vector<2x128xf32>
      %111 = tpu.matmul %103, %105, %cst_77 {dimension_numbers = #tpu.dot_dimension_numbers<[1], [0], [0], [1], [0, 0, 1, 1], [], []>} : vector<2x128xf32>, vector<128x128xf32>, vector<2x128xf32> -> vector<2x128xf32>
      %112 = vector.broadcast %106 : vector<1x128xf32> to vector<2x128xf32>
      %113 = arith.addf %111, %112 : vector<2x128xf32>
      %cst_78 = arith.constant dense<0.000000e+00> : vector<128xf32>
      %114 = vector.multi_reduction <add>, %113, %cst_78 [0] : vector<2x128xf32> to vector<128xf32>
      %115 = vector.shape_cast %114 : vector<128xf32> to vector<1x128xf32>
      %cst_79 = arith.constant 2.000000e+00 : f32
      %116 = vector.broadcast %cst_79 : f32 to vector<1x128xf32>
      %117 = arith.divf %115, %116 : vector<1x128xf32>
      %118 = arith.mulf %113, %113 : vector<2x128xf32>
      %cst_80 = arith.constant dense<0.000000e+00> : vector<128xf32>
      %119 = vector.multi_reduction <add>, %118, %cst_80 [0] : vector<2x128xf32> to vector<128xf32>
      %120 = vector.shape_cast %119 : vector<128xf32> to vector<1x128xf32>
      %cst_81 = arith.constant 2.000000e+00 : f32
      %121 = vector.broadcast %cst_81 : f32 to vector<1x128xf32>
      %122 = arith.divf %120, %121 : vector<1x128xf32>
      %123 = arith.mulf %117, %117 : vector<1x128xf32>
      %124 = arith.subf %122, %123 : vector<1x128xf32>
      %125 = vector.broadcast %117 : vector<1x128xf32> to vector<2x128xf32>
      %126 = arith.subf %113, %125 : vector<2x128xf32>
      %cst_82 = arith.constant 9.99999974E-6 : f32
      %127 = vector.broadcast %cst_82 : f32 to vector<1x128xf32>
      %128 = arith.addf %124, %127 : vector<1x128xf32>
      %129 = math.rsqrt %128 : vector<1x128xf32>
      %130 = vector.broadcast %129 : vector<1x128xf32> to vector<2x128xf32>
      %131 = arith.mulf %126, %130 : vector<2x128xf32>
      %132 = vector.broadcast %107 : vector<1x128xf32> to vector<2x128xf32>
      %133 = arith.mulf %131, %132 : vector<2x128xf32>
      %134 = vector.broadcast %108 : vector<1x128xf32> to vector<2x128xf32>
      %135 = arith.addf %133, %134 : vector<2x128xf32>
      %cst_83 = arith.constant 0.000000e+00 : f32
      %136 = vector.broadcast %cst_83 : f32 to vector<2x128xf32>
      %137 = arith.maximumf %135, %136 : vector<2x128xf32>
      %cst_84 = arith.constant dense<0.000000e+00> : vector<2x128xf32>
      %138 = tpu.matmul %137, %109, %cst_84 {dimension_numbers = #tpu.dot_dimension_numbers<[1], [0], [0], [1], [0, 0, 1, 1], [], []>} : vector<2x128xf32>, vector<128x128xf32>, vector<2x128xf32> -> vector<2x128xf32>
      %139 = vector.broadcast %110 : vector<1x128xf32> to vector<2x128xf32>
      %140 = arith.addf %138, %139 : vector<2x128xf32>
      %c0_85 = arith.constant 0 : index
      %c0_86 = arith.constant 0 : index
      %141 = vector.load %arg20[%c0_85, %c0_86] : memref<2x128xf32, #tpu.memory_space<vmem>>, vector<2x128xf32>
      tpu.vector_store %arg20[%c0_85, %c0_86], %140 {strides = array<i32>} : memref<2x128xf32, #tpu.memory_space<vmem>>, vector<2x128xf32>,
    } else {
    }
    return
  }
  func.func @transform_0(%arg0: i32) -> (i32, i32) {
    %c0_i32 = arith.constant 0 : i32
    %c0_i32_0 = arith.constant 0 : i32
    return %arg0, %c0_i32 : i32, i32
  }
  func.func @transform_1(%arg0: i32) -> (i32, i32) {
    %c0_i32 = arith.constant 0 : i32
    %c0_i32_0 = arith.constant 0 : i32
    %c0_i32_1 = arith.constant 0 : i32
    return %c0_i32, %c0_i32_0 : i32, i32
  }
  func.func @transform_2(%arg0: i32) -> (i32, i32) {
    %c0_i32 = arith.constant 0 : i32
    %c0_i32_0 = arith.constant 0 : i32
    %c0_i32_1 = arith.constant 0 : i32
    return %c0_i32, %c0_i32_0 : i32, i32
  }
  func.func @transform_3(%arg0: i32) -> (i32, i32) {
    %c0_i32 = arith.constant 0 : i32
    %c0_i32_0 = arith.constant 0 : i32
    %c0_i32_1 = arith.constant 0 : i32
    return %c0_i32, %c0_i32_0 : i32, i32
  }
  func.func @transform_4(%arg0: i32) -> (i32, i32) {
    %c0_i32 = arith.constant 0 : i32
    %c0_i32_0 = arith.constant 0 : i32
    %c0_i32_1 = arith.constant 0 : i32
    return %c0_i32, %c0_i32_0 : i32, i32
  }
  func.func @transform_5(%arg0: i32) -> (i32, i32) {
    %c0_i32 = arith.constant 0 : i32
    %c0_i32_0 = arith.constant 0 : i32
    %c0_i32_1 = arith.constant 0 : i32
    return %c0_i32, %c0_i32_0 : i32, i32
  }
  func.func @transform_6(%arg0: i32) -> (i32, i32) {
    %c0_i32 = arith.constant 0 : i32
    %c0_i32_0 = arith.constant 0 : i32
    %c0_i32_1 = arith.constant 0 : i32
    return %c0_i32, %c0_i32_0 : i32, i32
  }
  func.func @transform_7(%arg0: i32) -> (i32, i32) {
    %c0_i32 = arith.constant 0 : i32
    %c0_i32_0 = arith.constant 0 : i32
    %c0_i32_1 = arith.constant 0 : i32
    return %c0_i32, %c0_i32_0 : i32, i32
  }
  func.func @transform_8(%arg0: i32) -> (i32, i32) {
    %c0_i32 = arith.constant 0 : i32
    %c0_i32_0 = arith.constant 0 : i32
    %c0_i32_1 = arith.constant 0 : i32
    return %c0_i32, %c0_i32_0 : i32, i32
  }
  func.func @transform_9(%arg0: i32) -> (i32, i32) {
    %c0_i32 = arith.constant 0 : i32
    %c0_i32_0 = arith.constant 0 : i32
    %c0_i32_1 = arith.constant 0 : i32
    return %c0_i32, %c0_i32_0 : i32, i32
  }
  func.func @transform_10(%arg0: i32) -> (i32, i32) {
    %c0_i32 = arith.constant 0 : i32
    %c0_i32_0 = arith.constant 0 : i32
    %c0_i32_1 = arith.constant 0 : i32
    return %c0_i32, %c0_i32_0 : i32, i32
  }
  func.func @transform_11(%arg0: i32) -> (i32, i32) {
    %c0_i32 = arith.constant 0 : i32
    %c0_i32_0 = arith.constant 0 : i32
    %c0_i32_1 = arith.constant 0 : i32
    return %c0_i32, %c0_i32_0 : i32, i32
  }
  func.func @transform_12(%arg0: i32) -> (i32, i32) {
    %c0_i32 = arith.constant 0 : i32
    %c0_i32_0 = arith.constant 0 : i32
    %c0_i32_1 = arith.constant 0 : i32
    return %c0_i32, %c0_i32_0 : i32, i32
  }
  func.func @transform_13(%arg0: i32) -> (i32, i32) {
    %c0_i32 = arith.constant 0 : i32
    %c0_i32_0 = arith.constant 0 : i32
    %c0_i32_1 = arith.constant 0 : i32
    return %c0_i32, %c0_i32_0 : i32, i32
  }
  func.func @transform_14(%arg0: i32) -> (i32, i32) {
    %c0_i32 = arith.constant 0 : i32
    %c0_i32_0 = arith.constant 0 : i32
    %c0_i32_1 = arith.constant 0 : i32
    return %c0_i32, %c0_i32_0 : i32, i32
  }
  func.func @transform_15(%arg0: i32) -> (i32, i32) {
    %c0_i32 = arith.constant 0 : i32
    %c0_i32_0 = arith.constant 0 : i32
    %c0_i32_1 = arith.constant 0 : i32
    return %c0_i32, %c0_i32_0 : i32, i32
  }
  func.func @transform_16(%arg0: i32) -> (i32, i32) {
    %c0_i32 = arith.constant 0 : i32
    %c0_i32_0 = arith.constant 0 : i32
    %c0_i32_1 = arith.constant 0 : i32
    return %c0_i32, %c0_i32_0 : i32, i32
  }
  func.func @transform_17(%arg0: i32) -> (i32, i32) {
    %c0_i32 = arith.constant 0 : i32
    %c0_i32_0 = arith.constant 0 : i32
    %c0_i32_1 = arith.constant 0 : i32
    return %c0_i32, %c0_i32_0 : i32, i32
  }
  func.func @transform_18(%arg0: i32) -> (i32, i32) {
    %c0_i32 = arith.constant 0 : i32
    %c0_i32_0 = arith.constant 0 : i32
    %c0_i32_1 = arith.constant 0 : i32
    return %c0_i32, %c0_i32_0 : i32, i32
  }
  func.func @transform_19(%arg0: i32) -> (i32, i32) {
    %c0_i32 = arith.constant 0 : i32
    %c0_i32_0 = arith.constant 0 : i32
    %c0_i32_1 = arith.constant 0 : i32
    return %c0_i32, %c0_i32_0 : i32, i32
  }
}

</mosaic_0001>

<llo_original>
// kernel: online_forward.1
$region0: #{online_forward.1}
  #allocation0 [shape = 'u32[]', space=smem, size = 0x4, offset = 0x4, fixed_abs, tag = 'smem constant byte address 0x4 - core index']
  #allocation1 [shape = 'u32[144,128]{1,0:T(1,128)}', space=vmem, size = 0x12000, scoped, tag = 'internal scratch']
  #allocation2 [shape = 'f32[512,128]{1,0:T(8,128)}', space=vmem, size = 0x40000, scoped, tag = 'scratch operand']
  #allocation3 [shape = 'f32[8,128]{1,0:T(8,128)}', space=vmem, size = 0x1000, scoped, tag = 'scratch operand']
  %s0 = inlined_call_operand.vmem [shape: bf16[512,32], index: 0, kind: input, shape index: {}]
  %s1 = inlined_call_operand.vmem [shape: bf16[32,128], index: 1, kind: input, shape index: {}]
  %s2 = inlined_call_operand.vmem [shape: f32[1,128], index: 2, kind: input, shape index: {}]
  %s3 = inlined_call_operand.vmem [shape: f32[1,128], index: 3, kind: input, shape index: {}]
  %s4 = inlined_call_operand.vmem [shape: f32[1,128], index: 4, kind: input, shape index: {}]
  %s5 = inlined_call_operand.vmem [shape: f32[128,128], index: 5, kind: input, shape index: {}]
  %s6 = inlined_call_operand.vmem [shape: f32[1,128], index: 6, kind: input, shape index: {}]
  %s7 = inlined_call_operand.vmem [shape: f32[1,128], index: 7, kind: input, shape index: {}]
  %s8 = inlined_call_operand.vmem [shape: f32[1,128], index: 8, kind: input, shape index: {}]
  %s9 = inlined_call_operand.vmem [shape: f32[128,128], index: 9, kind: input, shape index: {}]
  %s10 = inlined_call_operand.vmem [shape: f32[1,128], index: 10, kind: input, shape index: {}]
  %s11 = inlined_call_operand.vmem [shape: f32[128,128], index: 11, kind: input, shape index: {}]
  %s12 = inlined_call_operand.vmem [shape: f32[1,128], index: 12, kind: input, shape index: {}]
  %s13 = inlined_call_operand.vmem [shape: f32[1,128], index: 13, kind: input, shape index: {}]
  %s14 = inlined_call_operand.vmem [shape: f32[1,128], index: 14, kind: input, shape index: {}]
  %s15 = inlined_call_operand.vmem [shape: f32[128,128], index: 15, kind: input, shape index: {}]
  %s16 = inlined_call_operand.vmem [shape: f32[1,128], index: 16, kind: input, shape index: {}]
  %s17 = inlined_call_operand.hbm [shape: f32[2,128], index: 17, kind: output, shape index: {0}]
  %s18 = inlined_call_operand.hbm [shape: f32[2,128], index: 18, kind: output, shape index: {1}]
  %s19 = inlined_call_operand.hbm [shape: f32[2,128], index: 19, kind: output, shape index: {2}]
  %20 = xla_tuple %s17, %s18, %s19
  %s21 = sld [smem:[#allocation0]]
  $region125: #{online_forward.1} parent=0
    _
  %s23 = ssub.s32 1, %s21
  %s24 = scalar_select 0, %s23, %s21
  $region1: #{online_forward.1} parent=0
    #allocation4 [shape = 'u8[1024]{0}', space=vmem, size = 0x400, scoped, tag = 'output window, operand 0, single buffered']
    #allocation5 [shape = 's32[2]{0}', space=sflag, size = 0x8, scoped, tag = 'scoped memory for online_forward.1']
    #allocation6 [shape = 'u8[1024]{0}', space=vmem, size = 0x400, scoped, tag = 'output window, operand 1, single buffered']
    #allocation7 [shape = 's32[1]{0}', space=sflag, size = 0x4, scoped, tag = 'scoped memory for online_forward.1']
    #allocation8 [shape = 'u8[1024]{0}', space=vmem, size = 0x400, scoped, tag = 'output window, operand 2, single buffered']
    %25 = vsyncpa [#allocation5], 0
    %26 = vsyncpa [#allocation7], 0
    loop: start=0, step=1, limit=4
    $region2: #{online_forward.1} parent=1 // loop_pre_header
      _
    $region3: #{online_forward.1} parent=1 // loop_header
      %s28 = sphi 0, %s32
      %p29 = scmp.ge.s32.totalorder %s28, 4
      %s38 = sphi 0, %s40
      %s41 = sphi 0, %s38
      %s42 = sphi 0, %s41
      %s58 = sphi 0, %s42
      %s62 = sphi 0, %s62
      %s64 = sphi 0, %s62
      %s65 = sphi 0, %s64
      %s79 = sphi 0, %s65
      %s83 = sphi 0, %s83
      %s85 = sphi 0, %s83
      %s86 = sphi 0, %s85
      %s100 = sphi 0, %s86
      %s104 = sphi 0, %s104
      %s106 = sphi 0, %s104
      %s107 = sphi 0, %s106
      %s121 = sphi 0, %s107
      %s125 = sphi 0, %s125
      %s127 = sphi 0, %s125
      %s128 = sphi 0, %s127
      %s142 = sphi 0, %s128
      %s146 = sphi 0, %s146
      %s148 = sphi 0, %s146
      %s149 = sphi 0, %s148
      %s163 = sphi 0, %s149
      %s167 = sphi 0, %s167
      %s169 = sphi 0, %s167
      %s170 = sphi 0, %s169
      %s184 = sphi 0, %s170
      %s188 = sphi 0, %s188
      %s190 = sphi 0, %s188
      %s191 = sphi 0, %s190
      %s205 = sphi 0, %s191
      %s209 = sphi 0, %s209
      %s211 = sphi 0, %s209
      %s212 = sphi 0, %s211
      %s226 = sphi 0, %s212
      %s230 = sphi 0, %s230
      %s232 = sphi 0, %s230
      %s233 = sphi 0, %s232
      %s247 = sphi 0, %s233
      %s251 = sphi 0, %s251
      %s253 = sphi 0, %s251
      %s254 = sphi 0, %s253
      %s268 = sphi 0, %s254
      %s272 = sphi 0, %s272
      %s274 = sphi 0, %s272
      %s275 = sphi 0, %s274
      %s289 = sphi 0, %s275
      %s293 = sphi 0, %s293
      %s295 = sphi 0, %s293
      %s296 = sphi 0, %s295
      %s310 = sphi 0, %s296
      %s314 = sphi 0, %s314
      %s316 = sphi 0, %s314
      %s317 = sphi 0, %s316
      %s331 = sphi 0, %s317
      %s335 = sphi 0, %s335
      %s337 = sphi 0, %s335
      %s338 = sphi 0, %s337
      %s352 = sphi 0, %s338
      %s356 = sphi 0, %s356
      %s358 = sphi 0, %s356
      %s359 = sphi 0, %s358
      %s373 = sphi 0, %s359
      %s377 = sphi 0, %s377
      %s379 = sphi 0, %s377
      %s380 = sphi 0, %s379
      %s394 = sphi 0, %s380
      %s398 = sphi 0, %s398
      %s400 = sphi 0, %s398
      %s401 = sphi 0, %s400
      %s415 = sphi 0, %s401
      %s419 = sphi 0, %s419
      %s421 = sphi 0, %s419
      %s422 = sphi 0, %s421
      %s436 = sphi 0, %s422
      %s440 = sphi 0, %s440
      %s442 = sphi 0, %s440
      %s443 = sphi 0, %s442
      %s457 = sphi 0, %s443
    $region4: #{online_forward.1} parent=1 // loop_header_branch
      %31 = sbr.rel (%p29) target = $region8
    $region5: #{online_forward.1} parent=1 // loop_body
      %s33 = ssub.s32 %s28, 1
      %s34 = ssub.s32 %s28, 2
      %s35 = sadd.s32 %s28, 1
      %s36 = ssub.s32 %s28, %s35
      %p37 = scmp.eq.s32.totalorder %s36, 0
      %s39 = sadd.s32 %s38, 1
      %s40 = scalar_select %p37, %s38, %s39
      %p43 = pneg %p37
      %p44 = scmp.eq.s32.totalorder %s28, 1
      %p45 = por %p43, %p44
      %p46 = scmp.ne.s32.totalorder %s38, %s41
      %p47 = scmp.eq.s32.totalorder %s28, 0
      %p48 = por %p46, %p47
      %p49 = scmp.ne.s32.totalorder %s38, %s41
      %p50 = scmp.eq.s32.totalorder %s33, 1
      %p51 = por %p49, %p50
      %p52 = scmp.ne.s32.totalorder %s41, %s42
      %p53 = scmp.eq.s32.totalorder %s33, 0
      %p54 = por %p52, %p53
      %p55 = scmp.ne.s32.totalorder %s41, %s42
      %p56 = scmp.eq.s32.totalorder %s34, 1
      %p57 = por %p55, %p56
      %p59 = scmp.ne.s32.totalorder %s42, %s58
      %p60 = scmp.eq.s32.totalorder %s34, 0
      %p61 = por %p59, %p60
      %s63 = sadd.s32 %s62, 1
      %p66 = scmp.eq.s32.totalorder %s28, 1
      %p67 = scmp.ne.s32.totalorder %s62, %s64
      %p68 = scmp.eq.s32.totalorder %s28, 0
      %p69 = por %p67, %p68
      %p70 = scmp.ne.s32.totalorder %s62, %s64
      %p71 = scmp.eq.s32.totalorder %s33, 1
      %p72 = por %p70, %p71
      %p73 = scmp.ne.s32.totalorder %s64, %s65
      %p74 = scmp.eq.s32.totalorder %s33, 0
      %p75 = por %p73, %p74
      %p76 = scmp.ne.s32.totalorder %s64, %s65
      %p77 = scmp.eq.s32.totalorder %s34, 1
      %p78 = por %p76, %p77
      %p80 = scmp.ne.s32.totalorder %s65, %s79
      %p81 = scmp.eq.s32.totalorder %s34, 0
      %p82 = por %p80, %p81
      %s84 = sadd.s32 %s83, 1
      %p87 = scmp.eq.s32.totalorder %s28, 1
      %p88 = scmp.ne.s32.totalorder %s83, %s85
      %p89 = scmp.eq.s32.totalorder %s28, 0
      %p90 = por %p88, %p89
      %p91 = scmp.ne.s32.totalorder %s83, %s85
      %p92 = scmp.eq.s32.totalorder %s33, 1
      %p93 = por %p91, %p92
      %p94 = scmp.ne.s32.totalorder %s85, %s86
      %p95 = scmp.eq.s32.totalorder %s33, 0
      %p96 = por %p94, %p95
      %p97 = scmp.ne.s32.totalorder %s85, %s86
      %p98 = scmp.eq.s32.totalorder %s34, 1
      %p99 = por %p97, %p98
      %p101 = scmp.ne.s32.totalorder %s86, %s100
      %p102 = scmp.eq.s32.totalorder %s34, 0
      %p103 = por %p101, %p102
      %s105 = sadd.s32 %s104, 1
      %p108 = scmp.eq.s32.totalorder %s28, 1
      %p109 = scmp.ne.s32.totalorder %s104, %s106
      %p110 = scmp.eq.s32.totalorder %s28, 0
      %p111 = por %p109, %p110
      %p112 = scmp.ne.s32.totalorder %s104, %s106
      %p113 = scmp.eq.s32.totalorder %s33, 1
      %p114 = por %p112, %p113
      %p115 = scmp.ne.s32.totalorder %s106, %s107
      %p116 = scmp.eq.s32.totalorder %s33, 0
      %p117 = por %p115, %p116
      %p118 = scmp.ne.s32.totalorder %s106, %s107
      %p119 = scmp.eq.s32.totalorder %s34, 1
      %p120 = por %p118, %p119
      %p122 = scmp.ne.s32.totalorder %s107, %s121
      %p123 = scmp.eq.s32.totalorder %s34, 0
      %p124 = por %p122, %p123
      %s126 = sadd.s32 %s125, 1
      %p129 = scmp.eq.s32.totalorder %s28, 1
      %p130 = scmp.ne.s32.totalorder %s125, %s127
      %p131 = scmp.eq.s32.totalorder %s28, 0
      %p132 = por %p130, %p131
      %p133 = scmp.ne.s32.totalorder %s125, %s127
      %p134 = scmp.eq.s32.totalorder %s33, 1
      %p135 = por %p133, %p134
      %p136 = scmp.ne.s32.totalorder %s127, %s128
      %p137 = scmp.eq.s32.totalorder %s33, 0
      %p138 = por %p136, %p137
      %p139 = scmp.ne.s32.totalorder %s127, %s128
      %p140 = scmp.eq.s32.totalorder %s34, 1
      %p141 = por %p139, %p140
      %p143 = scmp.ne.s32.totalorder %s128, %s142
      %p144 = scmp.eq.s32.totalorder %s34, 0
      %p145 = por %p143, %p144
      %s147 = sadd.s32 %s146, 1
      %p150 = scmp.eq.s32.totalorder %s28, 1
      %p151 = scmp.ne.s32.totalorder %s146, %s148
      %p152 = scmp.eq.s32.totalorder %s28, 0
      %p153 = por %p151, %p152
      %p154 = scmp.ne.s32.totalorder %s146, %s148
      %p155 = scmp.eq.s32.totalorder %s33, 1
      %p156 = por %p154, %p155
      %p157 = scmp.ne.s32.totalorder %s148, %s149
      %p158 = scmp.eq.s32.totalorder %s33, 0
      %p159 = por %p157, %p158
      %p160 = scmp.ne.s32.totalorder %s148, %s149
      %p161 = scmp.eq.s32.totalorder %s34, 1
      %p162 = por %p160, %p161
      %p164 = scmp.ne.s32.totalorder %s149, %s163
      %p165 = scmp.eq.s32.totalorder %s34, 0
      %p166 = por %p164, %p165
      %s168 = sadd.s32 %s167, 1
      %p171 = scmp.eq.s32.totalorder %s28, 1
      %p172 = scmp.ne.s32.totalorder %s167, %s169
      %p173 = scmp.eq.s32.totalorder %s28, 0
      %p174 = por %p172, %p173
      %p175 = scmp.ne.s32.totalorder %s167, %s169
      %p176 = scmp.eq.s32.totalorder %s33, 1
      %p177 = por %p175, %p176
      %p178 = scmp.ne.s32.totalorder %s169, %s170
      %p179 = scmp.eq.s32.totalorder %s33, 0
      %p180 = por %p178, %p179
      %p181 = scmp.ne.s32.totalorder %s169, %s170
      %p182 = scmp.eq.s32.totalorder %s34, 1
      %p183 = por %p181, %p182
      %p185 = scmp.ne.s32.totalorder %s170, %s184
      %p186 = scmp.eq.s32.totalorder %s34, 0
      %p187 = por %p185, %p186
      %s189 = sadd.s32 %s188, 1
      %p192 = scmp.eq.s32.totalorder %s28, 1
      %p193 = scmp.ne.s32.totalorder %s188, %s190
      %p194 = scmp.eq.s32.totalorder %s28, 0
      %p195 = por %p193, %p194
      %p196 = scmp.ne.s32.totalorder %s188, %s190
      %p197 = scmp.eq.s32.totalorder %s33, 1
      %p198 = por %p196, %p197
      %p199 = scmp.ne.s32.totalorder %s190, %s191
      %p200 = scmp.eq.s32.totalorder %s33, 0
      %p201 = por %p199, %p200
      %p202 = scmp.ne.s32.totalorder %s190, %s191
      %p203 = scmp.eq.s32.totalorder %s34, 1
      %p204 = por %p202, %p203
      %p206 = scmp.ne.s32.totalorder %s191, %s205
      %p207 = scmp.eq.s32.totalorder %s34, 0
      %p208 = por %p206, %p207
      %s210 = sadd.s32 %s209, 1
      %p213 = scmp.eq.s32.totalorder %s28, 1
      %p214 = scmp.ne.s32.totalorder %s209, %s211
      %p215 = scmp.eq.s32.totalorder %s28, 0
      %p216 = por %p214, %p215
      %p217 = scmp.ne.s32.totalorder %s209, %s211
      %p218 = scmp.eq.s32.totalorder %s33, 1
      %p219 = por %p217, %p218
      %p220 = scmp.ne.s32.totalorder %s211, %s212
      %p221 = scmp.eq.s32.totalorder %s33, 0
      %p222 = por %p220, %p221
      %p223 = scmp.ne.s32.totalorder %s211, %s212
      %p224 = scmp.eq.s32.totalorder %s34, 1
      %p225 = por %p223, %p224
      %p227 = scmp.ne.s32.totalorder %s212, %s226
      %p228 = scmp.eq.s32.totalorder %s34, 0
      %p229 = por %p227, %p228
      %s231 = sadd.s32 %s230, 1
      %p234 = scmp.eq.s32.totalorder %s28, 1
      %p235 = scmp.ne.s32.totalorder %s230, %s232
      %p236 = scmp.eq.s32.totalorder %s28, 0
      %p237 = por %p235, %p236
      %p238 = scmp.ne.s32.totalorder %s230, %s232
      %p239 = scmp.eq.s32.totalorder %s33, 1
      %p240 = por %p238, %p239
      %p241 = scmp.ne.s32.totalorder %s232, %s233
      %p242 = scmp.eq.s32.totalorder %s33, 0
      %p243 = por %p241, %p242
      %p244 = scmp.ne.s32.totalorder %s232, %s233
      %p245 = scmp.eq.s32.totalorder %s34, 1
      %p246 = por %p244, %p245
      %p248 = scmp.ne.s32.totalorder %s233, %s247
      %p249 = scmp.eq.s32.totalorder %s34, 0
      %p250 = por %p248, %p249
      %s252 = sadd.s32 %s251, 1
      %p255 = scmp.eq.s32.totalorder %s28, 1
      %p256 = scmp.ne.s32.totalorder %s251, %s253
      %p257 = scmp.eq.s32.totalorder %s28, 0
      %p258 = por %p256, %p257
      %p259 = scmp.ne.s32.totalorder %s251, %s253
      %p260 = scmp.eq.s32.totalorder %s33, 1
      %p261 = por %p259, %p260
      %p262 = scmp.ne.s32.totalorder %s253, %s254
      %p263 = scmp.eq.s32.totalorder %s33, 0
      %p264 = por %p262, %p263
      %p265 = scmp.ne.s32.totalorder %s253, %s254
      %p266 = scmp.eq.s32.totalorder %s34, 1
      %p267 = por %p265, %p266
      %p269 = scmp.ne.s32.totalorder %s254, %s268
      %p270 = scmp.eq.s32.totalorder %s34, 0
      %p271 = por %p269, %p270
      %s273 = sadd.s32 %s272, 1
      %p276 = scmp.eq.s32.totalorder %s28, 1
      %p277 = scmp.ne.s32.totalorder %s272, %s274
      %p278 = scmp.eq.s32.totalorder %s28, 0
      %p279 = por %p277, %p278
      %p280 = scmp.ne.s32.totalorder %s272, %s274
      %p281 = scmp.eq.s32.totalorder %s33, 1
      %p282 = por %p280, %p281
      %p283 = scmp.ne.s32.totalorder %s274, %s275
      %p284 = scmp.eq.s32.totalorder %s33, 0
      %p285 = por %p283, %p284
      %p286 = scmp.ne.s32.totalorder %s274, %s275
      %p287 = scmp.eq.s32.totalorder %s34, 1
      %p288 = por %p286, %p287
      %p290 = scmp.ne.s32.totalorder %s275, %s289
      %p291 = scmp.eq.s32.totalorder %s34, 0
      %p292 = por %p290, %p291
      %s294 = sadd.s32 %s293, 1
      %p297 = scmp.eq.s32.totalorder %s28, 1
      %p298 = scmp.ne.s32.totalorder %s293, %s295
      %p299 = scmp.eq.s32.totalorder %s28, 0
      %p300 = por %p298, %p299
      %p301 = scmp.ne.s32.totalorder %s293, %s295
      %p302 = scmp.eq.s32.totalorder %s33, 1
      %p303 = por %p301, %p302
      %p304 = scmp.ne.s32.totalorder %s295, %s296
      %p305 = scmp.eq.s32.totalorder %s33, 0
      %p306 = por %p304, %p305
      %p307 = scmp.ne.s32.totalorder %s295, %s296
      %p308 = scmp.eq.s32.totalorder %s34, 1
      %p309 = por %p307, %p308
      %p311 = scmp.ne.s32.totalorder %s296, %s310
      %p312 = scmp.eq.s32.totalorder %s34, 0
      %p313 = por %p311, %p312
      %s315 = sadd.s32 %s314, 1
      %p318 = scmp.eq.s32.totalorder %s28, 1
      %p319 = scmp.ne.s32.totalorder %s314, %s316
      %p320 = scmp.eq.s32.totalorder %s28, 0
      %p321 = por %p319, %p320
      %p322 = scmp.ne.s32.totalorder %s314, %s316
      %p323 = scmp.eq.s32.totalorder %s33, 1
      %p324 = por %p322, %p323
      %p325 = scmp.ne.s32.totalorder %s316, %s317
      %p326 = scmp.eq.s32.totalorder %s33, 0
      %p327 = por %p325, %p326
      %p328 = scmp.ne.s32.totalorder %s316, %s317
      %p329 = scmp.eq.s32.totalorder %s34, 1
      %p330 = por %p328, %p329
      %p332 = scmp.ne.s32.totalorder %s317, %s331
      %p333 = scmp.eq.s32.totalorder %s34, 0
      %p334 = por %p332, %p333
      %s336 = sadd.s32 %s335, 1
      %p339 = scmp.eq.s32.totalorder %s28, 1
      %p340 = scmp.ne.s32.totalorder %s335, %s337
      %p341 = scmp.eq.s32.totalorder %s28, 0
      %p342 = por %p340, %p341
      %p343 = scmp.ne.s32.totalorder %s335, %s337
      %p344 = scmp.eq.s32.totalorder %s33, 1
      %p345 = por %p343, %p344
      %p346 = scmp.ne.s32.totalorder %s337, %s338
      %p347 = scmp.eq.s32.totalorder %s33, 0
      %p348 = por %p346, %p347
      %p349 = scmp.ne.s32.totalorder %s337, %s338
      %p350 = scmp.eq.s32.totalorder %s34, 1
      %p351 = por %p349, %p350
      %p353 = scmp.ne.s32.totalorder %s338, %s352
      %p354 = scmp.eq.s32.totalorder %s34, 0
      %p355 = por %p353, %p354
      %s357 = sadd.s32 %s356, 1
      %p360 = scmp.eq.s32.totalorder %s28, 1
      %p361 = scmp.ne.s32.totalorder %s356, %s358
      %p362 = scmp.eq.s32.totalorder %s28, 0
      %p363 = por %p361, %p362
      %p364 = scmp.ne.s32.totalorder %s356, %s358
      %p365 = scmp.eq.s32.totalorder %s33, 1
      %p366 = por %p364, %p365
      %p367 = scmp.ne.s32.totalorder %s358, %s359
      %p368 = scmp.eq.s32.totalorder %s33, 0
      %p369 = por %p367, %p368
      %p370 = scmp.ne.s32.totalorder %s358, %s359
      %p371 = scmp.eq.s32.totalorder %s34, 1
      %p372 = por %p370, %p371
      %p374 = scmp.ne.s32.totalorder %s359, %s373
      %p375 = scmp.eq.s32.totalorder %s34, 0
      %p376 = por %p374, %p375
      %s378 = sadd.s32 %s377, 1
      %p381 = scmp.eq.s32.totalorder %s28, 1
      %p382 = scmp.ne.s32.totalorder %s377, %s379
      %p383 = scmp.eq.s32.totalorder %s28, 0
      %p384 = por %p382, %p383
      %p385 = scmp.ne.s32.totalorder %s377, %s379
      %p386 = scmp.eq.s32.totalorder %s33, 1
      %p387 = por %p385, %p386
      %p388 = scmp.ne.s32.totalorder %s379, %s380
      %p389 = scmp.eq.s32.totalorder %s33, 0
      %p390 = por %p388, %p389
      %p391 = scmp.ne.s32.totalorder %s379, %s380
      %p392 = scmp.eq.s32.totalorder %s34, 1
      %p393 = por %p391, %p392
      %p395 = scmp.ne.s32.totalorder %s380, %s394
      %p396 = scmp.eq.s32.totalorder %s34, 0
      %p397 = por %p395, %p396
      %s399 = sadd.s32 %s398, 1
      %p402 = scmp.eq.s32.totalorder %s28, 1
      %p403 = scmp.ne.s32.totalorder %s398, %s400
      %p404 = scmp.eq.s32.totalorder %s28, 0
      %p405 = por %p403, %p404
      %p406 = scmp.ne.s32.totalorder %s398, %s400
      %p407 = scmp.eq.s32.totalorder %s33, 1
      %p408 = por %p406, %p407
      %p409 = scmp.ne.s32.totalorder %s400, %s401
      %p410 = scmp.eq.s32.totalorder %s33, 0
      %p411 = por %p409, %p410
      %p412 = scmp.ne.s32.totalorder %s400, %s401
      %p413 = scmp.eq.s32.totalorder %s34, 1
      %p414 = por %p412, %p413
      %p416 = scmp.ne.s32.totalorder %s401, %s415
      %p417 = scmp.eq.s32.totalorder %s34, 0
      %p418 = por %p416, %p417
      %s420 = sadd.s32 %s419, 1
      %p423 = scmp.eq.s32.totalorder %s28, 1
      %p424 = scmp.ne.s32.totalorder %s419, %s421
      %p425 = scmp.eq.s32.totalorder %s28, 0
      %p426 = por %p424, %p425
      %p427 = scmp.ne.s32.totalorder %s419, %s421
      %p428 = scmp.eq.s32.totalorder %s33, 1
      %p429 = por %p427, %p428
      %p430 = scmp.ne.s32.totalorder %s421, %s422
      %p431 = scmp.eq.s32.totalorder %s33, 0
      %p432 = por %p430, %p431
      %p433 = scmp.ne.s32.totalorder %s421, %s422
      %p434 = scmp.eq.s32.totalorder %s34, 1
      %p435 = por %p433, %p434
      %p437 = scmp.ne.s32.totalorder %s422, %s436
      %p438 = scmp.eq.s32.totalorder %s34, 0
      %p439 = por %p437, %p438
      %s441 = sadd.s32 %s440, 1
      %p444 = scmp.eq.s32.totalorder %s28, 1
      %p445 = scmp.ne.s32.totalorder %s440, %s442
      %p446 = scmp.eq.s32.totalorder %s28, 0
      %p447 = por %p445, %p446
      %p448 = scmp.ne.s32.totalorder %s440, %s442
      %p449 = scmp.eq.s32.totalorder %s33, 1
      %p450 = por %p448, %p449
      %p451 = scmp.ne.s32.totalorder %s442, %s443
      %p452 = scmp.eq.s32.totalorder %s33, 0
      %p453 = por %p451, %p452
      %p454 = scmp.ne.s32.totalorder %s442, %s443
      %p455 = scmp.eq.s32.totalorder %s34, 1
      %p456 = por %p454, %p455
      %p458 = scmp.ne.s32.totalorder %s443, %s457
      %p459 = scmp.eq.s32.totalorder %s34, 0
      %p460 = por %p458, %p459
      %p461 = scmp.le.s32.totalorder 1, %s28
      %p462 = scmp.lt.s32.totalorder %s28, 3
      %p463 = pnand %p461, %p462
      %p464 = pneg %p463
      // Predicated region
      $region9: #{online_forward.1} parent=5 // pred_check
        _
      $region10: #{online_forward.1} parent=5 // pred_check_branch
        %466 = sbr.rel (%p463) target = $region12
      $region11: #{online_forward.1} parent=5 // pred_region
        %s467 = ssub.s32 %s28, 1
        // Predicated region
        $region13: #{online_forward.1} parent=11 // pred_check
          %p468 = pneg %p75
        $region14: #{online_forward.1} parent=11 // pred_check_branch
          %470 = sbr.rel (%p468) target = $region16
        $region15: #{online_forward.1} parent=11 // pred_region
          _
        $region16: #{online_forward.1} parent=11 // pred_fallthru
          _
        // Predicated region
        $region17: #{online_forward.1} parent=11 // pred_check
          %p471 = pneg %p96
        $region18: #{online_forward.1} parent=11 // pred_check_branch
          %473 = sbr.rel (%p471) target = $region20
        $region19: #{online_forward.1} parent=11 // pred_region
          _
        $region20: #{online_forward.1} parent=11 // pred_fallthru
          _
        // Predicated region
        $region21: #{online_forward.1} parent=11 // pred_check
          %p474 = pneg %p117
        $region22: #{online_forward.1} parent=11 // pred_check_branch
          %476 = sbr.rel (%p474) target = $region24
        $region23: #{online_forward.1} parent=11 // pred_region
          _
        $region24: #{online_forward.1} parent=11 // pred_fallthru
          _
        // Predicated region
        $region25: #{online_forward.1} parent=11 // pred_check
          %p477 = pneg %p138
        $region26: #{online_forward.1} parent=11 // pred_check_branch
          %479 = sbr.rel (%p477) target = $region28
        $region27: #{online_forward.1} parent=11 // pred_region
          _
        $region28: #{online_forward.1} parent=11 // pred_fallthru
          _
        // Predicated region
        $region29: #{online_forward.1} parent=11 // pred_check
          %p480 = pneg %p159
        $region30: #{online_forward.1} parent=11 // pred_check_branch
          %482 = sbr.rel (%p480) target = $region32
        $region31: #{online_forward.1} parent=11 // pred_region
          _
        $region32: #{online_forward.1} parent=11 // pred_fallthru
          _
        // Predicated region
        $region33: #{online_forward.1} parent=11 // pred_check
          %p483 = pneg %p180
        $region34: #{online_forward.1} parent=11 // pred_check_branch
          %485 = sbr.rel (%p483) target = $region36
        $region35: #{online_forward.1} parent=11 // pred_region
          _
        $region36: #{online_forward.1} parent=11 // pred_fallthru
          _
        // Predicated region
        $region37: #{online_forward.1} parent=11 // pred_check
          %p486 = pneg %p201
        $region38: #{online_forward.1} parent=11 // pred_check_branch
          %488 = sbr.rel (%p486) target = $region40
        $region39: #{online_forward.1} parent=11 // pred_region
          _
        $region40: #{online_forward.1} parent=11 // pred_fallthru
          _
        // Predicated region
        $region41: #{online_forward.1} parent=11 // pred_check
          %p489 = pneg %p222
        $region42: #{online_forward.1} parent=11 // pred_check_branch
          %491 = sbr.rel (%p489) target = $region44
        $region43: #{online_forward.1} parent=11 // pred_region
          _
        $region44: #{online_forward.1} parent=11 // pred_fallthru
          _
        // Predicated region
        $region45: #{online_forward.1} parent=11 // pred_check
          %p492 = pneg %p243
        $region46: #{online_forward.1} parent=11 // pred_check_branch
          %494 = sbr.rel (%p492) target = $region48
        $region47: #{online_forward.1} parent=11 // pred_region
          _
        $region48: #{online_forward.1} parent=11 // pred_fallthru
          _
        // Predicated region
        $region49: #{online_forward.1} parent=11 // pred_check
          %p495 = pneg %p264
        $region50: #{online_forward.1} parent=11 // pred_check_branch
          %497 = sbr.rel (%p495) target = $region52
        $region51: #{online_forward.1} parent=11 // pred_region
          _
        $region52: #{online_forward.1} parent=11 // pred_fallthru
          _
        // Predicated region
        $region53: #{online_forward.1} parent=11 // pred_check
          %p498 = pneg %p285
        $region54: #{online_forward.1} parent=11 // pred_check_branch
          %500 = sbr.rel (%p498) target = $region56
        $region55: #{online_forward.1} parent=11 // pred_region
          _
        $region56: #{online_forward.1} parent=11 // pred_fallthru
          _
        // Predicated region
        $region57: #{online_forward.1} parent=11 // pred_check
          %p501 = pneg %p306
        $region58: #{online_forward.1} parent=11 // pred_check_branch
          %503 = sbr.rel (%p501) target = $region60
        $region59: #{online_forward.1} parent=11 // pred_region
          _
        $region60: #{online_forward.1} parent=11 // pred_fallthru
          _
        // Predicated region
        $region61: #{online_forward.1} parent=11 // pred_check
          %p504 = pneg %p327
        $region62: #{online_forward.1} parent=11 // pred_check_branch
          %506 = sbr.rel (%p504) target = $region64
        $region63: #{online_forward.1} parent=11 // pred_region
          _
        $region64: #{online_forward.1} parent=11 // pred_fallthru
          _
        // Predicated region
        $region65: #{online_forward.1} parent=11 // pred_check
          %p507 = pneg %p348
        $region66: #{online_forward.1} parent=11 // pred_check_branch
          %509 = sbr.rel (%p507) target = $region68
        $region67: #{online_forward.1} parent=11 // pred_region
          _
        $region68: #{online_forward.1} parent=11 // pred_fallthru
          _
        // Predicated region
        $region69: #{online_forward.1} parent=11 // pred_check
          %p510 = pneg %p369
        $region70: #{online_forward.1} parent=11 // pred_check_branch
          %512 = sbr.rel (%p510) target = $region72
        $region71: #{online_forward.1} parent=11 // pred_region
          _
        $region72: #{online_forward.1} parent=11 // pred_fallthru
          _
        // Predicated region
        $region73: #{online_forward.1} parent=11 // pred_check
          %p513 = pneg %p390
        $region74: #{online_forward.1} parent=11 // pred_check_branch
          %515 = sbr.rel (%p513) target = $region76
        $region75: #{online_forward.1} parent=11 // pred_region
          _
        $region76: #{online_forward.1} parent=11 // pred_fallthru
          _
      $region12: #{online_forward.1} parent=5 // pred_fallthru
        _
      %p516 = scmp.lt.s32.totalorder %s28, 2
      // Predicated region
      $region77: #{online_forward.1} parent=5 // pred_check
        %p517 = pneg %p516
      $region78: #{online_forward.1} parent=5 // pred_check_branch
        %519 = sbr.rel (%p517) target = $region80
      $region79: #{online_forward.1} parent=5 // pred_region
        // Predicated region
        $region81: #{online_forward.1} parent=79 // pred_check
          %p520 = pneg %p48
        $region82: #{online_forward.1} parent=79 // pred_check_branch
          %522 = sbr.rel (%p520) target = $region84
        $region83: #{online_forward.1} parent=79 // pred_region
          %s523 = smul.u32 32, %s28
          %p524 = scmp.lt.s32.totalorder %s523, 63
          %s525 = scalar_select %p524, %s523, 63
          %s526 = smul.addr %s525, 4
          %s527 = scalar_lea.vmem %s0, %s526
          %s528 = smul.u32 32, %s28
        $region84: #{online_forward.1} parent=79 // pred_fallthru
          _
      $region80: #{online_forward.1} parent=5 // pred_fallthru
        _
      %p529 = scmp.le.s32.totalorder 1, %s28
      %p530 = scmp.lt.s32.totalorder %s28, 3
      %p531 = pnand %p529, %p530
      %p532 = pneg %p531
      // Predicated region
      $region85: #{online_forward.1} parent=5 // pred_check
        _
      $region86: #{online_forward.1} parent=5 // pred_check_branch
        %534 = sbr.rel (%p531) target = $region88
      $region87: #{online_forward.1} parent=5 // pred_region
        %s535 = ssub.s32 %s28, 1
        %s536 = smul.u32 32, %s33
        %p537 = scmp.lt.s32.totalorder %s536, 63
        %s538 = scalar_select %p537, %s536, 63
        %s539 = smul.addr %s538, 4
        %s540 = scalar_lea.vmem %s0, %s539
        %p541 = pneg %p54
        %p542 = pneg %p51
        %p543 = pneg %p75
        %p544 = pneg %p72
        %p545 = pneg %p96
        %p546 = pneg %p93
        %p547 = pneg %p117
        %p548 = pneg %p114
        %p549 = pneg %p138
        %p550 = pneg %p135
        %p551 = pneg %p159
        %p552 = pneg %p156
        %p553 = pneg %p180
        %p554 = pneg %p177
        %p555 = pneg %p201
        %p556 = pneg %p198
        %p557 = pneg %p222
        %p558 = pneg %p219
        %p559 = pneg %p243
        %p560 = pneg %p240
        %p561 = pneg %p264
        %p562 = pneg %p261
        %p563 = pneg %p285
        %p564 = pneg %p282
        %p565 = pneg %p306
        %p566 = pneg %p303
        %p567 = pneg %p327
        %p568 = pneg %p324
        %p569 = pneg %p348
        %p570 = pneg %p345
        %p571 = pneg %p369
        %p572 = pneg %p366
        %p573 = pneg %p390
        %p574 = pneg %p387
        %p575 = pneg %p411
        %p576 = pneg %p408
        %p577 = pneg %p432
        %p578 = pneg %p429
        %p579 = pneg %p453
        %p580 = pneg %p450
        %s581 = smul.u32 32, %s33
        %p582 = scmp.lt.s32.totalorder %s581, 63
        %s583 = scalar_select %p582, %s581, 63
        %s584 = smul.addr %s583, 4
        %s585 = scalar_lea.vmem %s0, %s584
        %s586 = smul.u32 32, %s33
        %p588 = scmp.eq.s32.totalorder %s33, 0
        // Predicated region
        $region89: #{online_forward.1} parent=87 // pred_check
          %p589 = pneg %p588
        $region90: #{online_forward.1} parent=87 // pred_check_branch
          %591 = sbr.rel (%p589) target = $region92
        $region91: #{online_forward.1} parent=87 // pred_region
          %592 = vst [vmem:[#allocation3] sm:$0xff] 0.0
        $region92: #{online_forward.1} parent=87 // pred_fallthru
          _
        %v593 = vld [vmem:[%s585] sm:$0xf]
        %v594 = vld [vmem:[%s585 + $0x4] sm:$0xf]
        %v595 = vld [vmem:[%s585 + $0x8] sm:$0xf]
        %v596 = vld [vmem:[%s585 + $0xc] sm:$0xf]
        %v597 = vld [vmem:[%s585 + $0x10] sm:$0xf]
        %v598 = vld [vmem:[%s585 + $0x14] sm:$0xf]
        %v599 = vld [vmem:[%s585 + $0x18] sm:$0xf]
        %v600 = vld [vmem:[%s585 + $0x1c] sm:$0xf]
        %v601 = vld [vmem:[%s585 + $0x20] sm:$0xf]
        %v602 = vld [vmem:[%s585 + $0x24] sm:$0xf]
        %v603 = vld [vmem:[%s585 + $0x28] sm:$0xf]
        %v604 = vld [vmem:[%s585 + $0x2c] sm:$0xf]
        %v605 = vld [vmem:[%s585 + $0x30] sm:$0xf]
        %v606 = vld [vmem:[%s585 + $0x34] sm:$0xf]
        %v607 = vld [vmem:[%s585 + $0x38] sm:$0xf]
        %v608 = vld [vmem:[%s585 + $0x3c] sm:$0xf]
        %v609 = vld [vmem:[%s585 + $0x40] sm:$0xf]
        %v610 = vld [vmem:[%s585 + $0x44] sm:$0xf]
        %v611 = vld [vmem:[%s585 + $0x48] sm:$0xf]
        %v612 = vld [vmem:[%s585 + $0x4c] sm:$0xf]
        %v613 = vld [vmem:[%s585 + $0x50] sm:$0xf]
        %v614 = vld [vmem:[%s585 + $0x54] sm:$0xf]
        %v615 = vld [vmem:[%s585 + $0x58] sm:$0xf]
        %v616 = vld [vmem:[%s585 + $0x5c] sm:$0xf]
        %v617 = vld [vmem:[%s585 + $0x60] sm:$0xf]
        %v618 = vld [vmem:[%s585 + $0x64] sm:$0xf]
        %v619 = vld [vmem:[%s585 + $0x68] sm:$0xf]
        %v620 = vld [vmem:[%s585 + $0x6c] sm:$0xf]
        %v621 = vld [vmem:[%s585 + $0x70] sm:$0xf]
        %v622 = vld [vmem:[%s585 + $0x74] sm:$0xf]
        %v623 = vld [vmem:[%s585 + $0x78] sm:$0xf]
        %v624 = vld [vmem:[%s585 + $0x7c] sm:$0xf]
        %v625 = vld [vmem:[%s1] sm:$0xf]
        %v626 = vld [vmem:[%s1 + $0x4] sm:$0xf]
        %v627 = vld [vmem:[%s1 + $0x8] sm:$0xf]
        %v628 = vld [vmem:[%s1 + $0xc] sm:$0xf]
        %v629 = vld [vmem:[%s2] sm:$0x1]
        %v631 = vlaneseq
        %v632 = vshrl.u32 %v631, 7
        %v633 = vsub.s32 0, %v632
        %v634 = vrot.slane %v629, %v633
        %v668 = vunpack.c.l.b16 %v593
        %v669 = vunpack.c.l.b16 %v594
        %v670 = vunpack.c.l.b16 %v595
        %v671 = vunpack.c.l.b16 %v596
        %v672 = vunpack.c.l.b16 %v597
        %v673 = vunpack.c.l.b16 %v598
        %v674 = vunpack.c.l.b16 %v599
        %v675 = vunpack.c.l.b16 %v600
        %v676 = vunpack.c.l.b16 %v601
        %v677 = vunpack.c.l.b16 %v602
        %v678 = vunpack.c.l.b16 %v603
        %v679 = vunpack.c.l.b16 %v604
        %v680 = vunpack.c.l.b16 %v605
        %v681 = vunpack.c.l.b16 %v606
        %v682 = vunpack.c.l.b16 %v607
        %v683 = vunpack.c.l.b16 %v608
        %v684 = vunpack.c.l.b16 %v609
        %v685 = vunpack.c.l.b16 %v610
        %v686 = vunpack.c.l.b16 %v611
        %v687 = vunpack.c.l.b16 %v612
        %v688 = vunpack.c.l.b16 %v613
        %v689 = vunpack.c.l.b16 %v614
        %v690 = vunpack.c.l.b16 %v615
        %v691 = vunpack.c.l.b16 %v616
        %v692 = vunpack.c.l.b16 %v617
        %v693 = vunpack.c.l.b16 %v618
        %v694 = vunpack.c.l.b16 %v619
        %v695 = vunpack.c.l.b16 %v620
        %v696 = vunpack.c.l.b16 %v621
        %v697 = vunpack.c.l.b16 %v622
        %v698 = vunpack.c.l.b16 %v623
        %v699 = vunpack.c.l.b16 %v624
        %v700 = vpack.c.b16 %v669, %v668
        %v701 = vpack.c.b16 %v671, %v670
        %v702 = vpack.c.b16 %v673, %v672
        %v703 = vpack.c.b16 %v675, %v674
        %v704 = vpack.c.b16 %v677, %v676
        %v705 = vpack.c.b16 %v679, %v678
        %v706 = vpack.c.b16 %v681, %v680
        %v707 = vpack.c.b16 %v683, %v682
        %v708 = vpack.c.b16 %v685, %v684
        %v709 = vpack.c.b16 %v687, %v686
        %v710 = vpack.c.b16 %v689, %v688
        %v711 = vpack.c.b16 %v691, %v690
        %v712 = vpack.c.b16 %v693, %v692
        %v713 = vpack.c.b16 %v695, %v694
        %v714 = vpack.c.b16 %v697, %v696
        %v715 = vpack.c.b16 %v699, %v698
        %v720 = vunpack.c.l.b16 %v625
        %v721 = vunpack.c.l.b16 %v626
        %v722 = vunpack.c.l.b16 %v627
        %v723 = vunpack.c.l.b16 %v628
        %v724 = vpack.c.b16 %v721, %v720
        %v725 = vpack.c.b16 %v723, %v722
        %vm728 = vcmask 261120
        %v730 = vsel %vm728, %v700, 0
        %v733 = vsel %vm728, %v701, 0
        %v736 = vsel %vm728, %v702, 0
        %v739 = vsel %vm728, %v703, 0
        %v742 = vsel %vm728, %v704, 0
        %v745 = vsel %vm728, %v705, 0
        %v748 = vsel %vm728, %v706, 0
        %v751 = vsel %vm728, %v707, 0
        %v754 = vsel %vm728, %v708, 0
        %v757 = vsel %vm728, %v709, 0
        %v760 = vsel %vm728, %v710, 0
        %v763 = vsel %vm728, %v711, 0
        %v766 = vsel %vm728, %v712, 0
        %v769 = vsel %vm728, %v713, 0
        %v772 = vsel %vm728, %v714, 0
        %v775 = vsel %vm728, %v715, 0
        %777 = vmatprep.subr.bf16.mxu0 0
        %778 = vmatpush1.bf16.msra.mxu0 %v724
        %779 = vmatprep.subr.bf16.mxu0 0
        %780 = vmatpush1.bf16.msra.mxu0 %v725
        %781 = vmatprep.subr.bf16.mxu0 0
        %782 = vmatpush1.bf16.msra.mxu0 0
        %783 = vmatprep.subr.bf16.mxu0 0
        %784 = vmatpush1.bf16.msra.mxu0 0
        %785 = vmatprep.subr.bf16.mxu0 0
        %786 = vmatpush1.bf16.msra.mxu0 0
        %787 = vmatprep.subr.bf16.mxu0 0
        %788 = vmatpush1.bf16.msra.mxu0 0
        %789 = vmatprep.subr.bf16.mxu0 0
        %790 = vmatpush1.bf16.msra.mxu0 0
        %791 = vmatprep.subr.bf16.mxu0 0
        %792 = vmatpush1.bf16.msra.mxu0 0
        %793 = vmatprep.subr.bf16.mxu0 0
        %794 = vmatpush1.bf16.msra.mxu0 0
        %795 = vmatprep.subr.bf16.mxu0 0
        %796 = vmatpush1.bf16.msra.mxu0 0
        %797 = vmatprep.subr.bf16.mxu0 0
        %798 = vmatpush1.bf16.msra.mxu0 0
        %799 = vmatprep.subr.bf16.mxu0 0
        %800 = vmatpush1.bf16.msra.mxu0 0
        %801 = vmatprep.subr.bf16.mxu0 0
        %802 = vmatpush1.bf16.msra.mxu0 0
        %803 = vmatprep.subr.bf16.mxu0 0
        %804 = vmatpush1.bf16.msra.mxu0 0
        %805 = vmatprep.subr.bf16.mxu0 0
        %806 = vmatpush1.bf16.msra.mxu0 0
        %807 = vmatprep.subr.bf16.mxu0 0
        %808 = vmatpush1.bf16.msra.mxu0 0
        %809 = vmatprep.mubr.bf16.mxu0 0
        %810 = vmatmul.mubr.bf16.gmra.mrb[0].mxu0 %v730
        %v811 = vpop.f32.mrb[0].mxu0
        %v812 = vadd.f32 %v634, %v811
        %v813 = vpop.f32.mrb[0].mxu0
        %v814 = vpop.f32.mrb[0].mxu0
        %v815 = vadd.f32 %v634, %v814
        %v816 = vpop.f32.mrb[0].mxu0
        %817 = vmatprep.mubr.bf16.mxu0 0
        %818 = vmatmul.mubr.bf16.gmra.mrb[0].mxu0 %v733
        %v819 = vpop.f32.mrb[0].mxu0
        %v820 = vadd.f32 %v634, %v819
        %v821 = vpop.f32.mrb[0].mxu0
        %v822 = vpop.f32.mrb[0].mxu0
        %v823 = vadd.f32 %v634, %v822
        %v824 = vpop.f32.mrb[0].mxu0
        %825 = vmatprep.mubr.bf16.mxu0 0
        %826 = vmatmul.mubr.bf16.gmra.mrb[0].mxu0 %v736
        %v827 = vpop.f32.mrb[0].mxu0
        %v828 = vadd.f32 %v634, %v827
        %v829 = vpop.f32.mrb[0].mxu0
        %v830 = vpop.f32.mrb[0].mxu0
        %v831 = vadd.f32 %v634, %v830
        %v832 = vpop.f32.mrb[0].mxu0
        %833 = vmatprep.mubr.bf16.mxu0 0
        %834 = vmatmul.mubr.bf16.gmra.mrb[0].mxu0 %v739
        %v835 = vpop.f32.mrb[0].mxu0
        %v836 = vadd.f32 %v634, %v835
        %v837 = vpop.f32.mrb[0].mxu0
        %v838 = vpop.f32.mrb[0].mxu0
        %v839 = vadd.f32 %v634, %v838
        %v840 = vpop.f32.mrb[0].mxu0
        %841 = vmatprep.mubr.bf16.mxu0 0
        %842 = vmatmul.mubr.bf16.gmra.mrb[0].mxu0 %v742
        %v843 = vpop.f32.mrb[0].mxu0
        %v844 = vadd.f32 %v634, %v843
        %v845 = vpop.f32.mrb[0].mxu0
        %v846 = vpop.f32.mrb[0].mxu0
        %v847 = vadd.f32 %v634, %v846
        %v848 = vpop.f32.mrb[0].mxu0
        %849 = vmatprep.mubr.bf16.mxu0 0
        %850 = vmatmul.mubr.bf16.gmra.mrb[0].mxu0 %v745
        %v851 = vpop.f32.mrb[0].mxu0
        %v852 = vadd.f32 %v634, %v851
        %v853 = vpop.f32.mrb[0].mxu0
        %v854 = vpop.f32.mrb[0].mxu0
        %v855 = vadd.f32 %v634, %v854
        %v856 = vpop.f32.mrb[0].mxu0
        %857 = vmatprep.mubr.bf16.mxu0 0
        %858 = vmatmul.mubr.bf16.gmra.mrb[0].mxu0 %v748
        %v859 = vpop.f32.mrb[0].mxu0
        %v860 = vadd.f32 %v634, %v859
        %v861 = vpop.f32.mrb[0].mxu0
        %v862 = vpop.f32.mrb[0].mxu0
        %v863 = vadd.f32 %v634, %v862
        %v864 = vpop.f32.mrb[0].mxu0
        %865 = vmatprep.mubr.bf16.mxu0 0
        %866 = vmatmul.mubr.bf16.gmra.mrb[0].mxu0 %v751
        %v867 = vpop.f32.mrb[0].mxu0
        %v868 = vadd.f32 %v634, %v867
        %v869 = vpop.f32.mrb[0].mxu0
        %v870 = vpop.f32.mrb[0].mxu0
        %v871 = vadd.f32 %v634, %v870
        %v872 = vpop.f32.mrb[0].mxu0
        %873 = vmatprep.mubr.bf16.mxu0 0
        %874 = vmatmul.mubr.bf16.gmra.mrb[0].mxu0 %v754
        %v875 = vpop.f32.mrb[0].mxu0
        %v876 = vadd.f32 %v634, %v875
        %v877 = vpop.f32.mrb[0].mxu0
        %v878 = vpop.f32.mrb[0].mxu0
        %v879 = vadd.f32 %v634, %v878
        %v880 = vpop.f32.mrb[0].mxu0
        %881 = vmatprep.mubr.bf16.mxu0 0
        %882 = vmatmul.mubr.bf16.gmra.mrb[0].mxu0 %v757
        %v883 = vpop.f32.mrb[0].mxu0
        %v884 = vadd.f32 %v634, %v883
        %v885 = vpop.f32.mrb[0].mxu0
        %v886 = vpop.f32.mrb[0].mxu0
        %v887 = vadd.f32 %v634, %v886
        %v888 = vpop.f32.mrb[0].mxu0
        %889 = vmatprep.mubr.bf16.mxu0 0
        %890 = vmatmul.mubr.bf16.gmra.mrb[0].mxu0 %v760
        %v891 = vpop.f32.mrb[0].mxu0
        %v892 = vadd.f32 %v634, %v891
        %v893 = vpop.f32.mrb[0].mxu0
        %v894 = vpop.f32.mrb[0].mxu0
        %v895 = vadd.f32 %v634, %v894
        %v896 = vpop.f32.mrb[0].mxu0
        %897 = vmatprep.mubr.bf16.mxu0 0
        %898 = vmatmul.mubr.bf16.gmra.mrb[0].mxu0 %v763
        %v899 = vpop.f32.mrb[0].mxu0
        %v900 = vadd.f32 %v634, %v899
        %v901 = vpop.f32.mrb[0].mxu0
        %v902 = vpop.f32.mrb[0].mxu0
        %v903 = vadd.f32 %v634, %v902
        %v904 = vpop.f32.mrb[0].mxu0
        %905 = vmatprep.mubr.bf16.mxu0 0
        %906 = vmatmul.mubr.bf16.gmra.mrb[0].mxu0 %v766
        %v907 = vpop.f32.mrb[0].mxu0
        %v908 = vadd.f32 %v634, %v907
        %v909 = vpop.f32.mrb[0].mxu0
        %v910 = vpop.f32.mrb[0].mxu0
        %v911 = vadd.f32 %v634, %v910
        %v912 = vpop.f32.mrb[0].mxu0
        %913 = vmatprep.mubr.bf16.mxu0 0
        %914 = vmatmul.mubr.bf16.gmra.mrb[0].mxu0 %v769
        %v915 = vpop.f32.mrb[0].mxu0
        %v916 = vadd.f32 %v634, %v915
        %v917 = vpop.f32.mrb[0].mxu0
        %v918 = vpop.f32.mrb[0].mxu0
        %v919 = vadd.f32 %v634, %v918
        %v920 = vpop.f32.mrb[0].mxu0
        %921 = vmatprep.mubr.bf16.mxu0 0
        %922 = vmatmul.mubr.bf16.gmra.mrb[0].mxu0 %v772
        %v923 = vpop.f32.mrb[0].mxu0
        %v924 = vadd.f32 %v634, %v923
        %v925 = vpop.f32.mrb[0].mxu0
        %v926 = vpop.f32.mrb[0].mxu0
        %v927 = vadd.f32 %v634, %v926
        %v928 = vpop.f32.mrb[0].mxu0
        %929 = vmatprep.mubr.bf16.mxu0 0
        %930 = vmatmul.mubr.bf16.gmra.mrb[0].mxu0 %v775
        %v931 = vpop.f32.mrb[0].mxu0
        %v932 = vadd.f32 %v634, %v931
        %v933 = vpop.f32.mrb[0].mxu0
        %v934 = vpop.f32.mrb[0].mxu0
        %v935 = vadd.f32 %v634, %v934
        %v936 = vpop.f32.mrb[0].mxu0
        %937 = vdwg.mxu0
        %s938 = smul.u32 %s33, 256
        %s939 = scalar_lea.vmem [#allocation2], %s938
        %940 = vst [vmem:[%s939] sm:$0xff] %v812
        %941 = vst [vmem:[%s939 + $0x8] sm:$0xff] %v815
        %942 = vst [vmem:[%s939 + $0x10] sm:$0xff] %v820
        %943 = vst [vmem:[%s939 + $0x18] sm:$0xff] %v823
        %944 = vst [vmem:[%s939 + $0x20] sm:$0xff] %v828
        %945 = vst [vmem:[%s939 + $0x28] sm:$0xff] %v831
        %946 = vst [vmem:[%s939 + $0x30] sm:$0xff] %v836
        %947 = vst [vmem:[%s939 + $0x38] sm:$0xff] %v839
        %948 = vst [vmem:[%s939 + $0x40] sm:$0xff] %v844
        %949 = vst [vmem:[%s939 + $0x48] sm:$0xff] %v847
        %950 = vst [vmem:[%s939 + $0x50] sm:$0xff] %v852
        %951 = vst [vmem:[%s939 + $0x58] sm:$0xff] %v855
        %952 = vst [vmem:[%s939 + $0x60] sm:$0xff] %v860
        %953 = vst [vmem:[%s939 + $0x68] sm:$0xff] %v863
        %954 = vst [vmem:[%s939 + $0x70] sm:$0xff] %v868
        %955 = vst [vmem:[%s939 + $0x78] sm:$0xff] %v871
        %956 = vst [vmem:[%s939 + $0x80] sm:$0xff] %v876
        %957 = vst [vmem:[%s939 + $0x88] sm:$0xff] %v879
        %958 = vst [vmem:[%s939 + $0x90] sm:$0xff] %v884
        %959 = vst [vmem:[%s939 + $0x98] sm:$0xff] %v887
        %960 = vst [vmem:[%s939 + $0xa0] sm:$0xff] %v892
        %961 = vst [vmem:[%s939 + $0xa8] sm:$0xff] %v895
        %962 = vst [vmem:[%s939 + $0xb0] sm:$0xff] %v900
        %963 = vst [vmem:[%s939 + $0xb8] sm:$0xff] %v903
        %964 = vst [vmem:[%s939 + $0xc0] sm:$0xff] %v908
        %965 = vst [vmem:[%s939 + $0xc8] sm:$0xff] %v911
        %966 = vst [vmem:[%s939 + $0xd0] sm:$0xff] %v916
        %967 = vst [vmem:[%s939 + $0xd8] sm:$0xff] %v919
        %968 = vst [vmem:[%s939 + $0xe0] sm:$0xff] %v924
        %969 = vst [vmem:[%s939 + $0xe8] sm:$0xff] %v927
        %970 = vst [vmem:[%s939 + $0xf0] sm:$0xff] %v932
        %971 = vst [vmem:[%s939 + $0xf8] sm:$0xff] %v935
        %v972 = vld [vmem:[#allocation3] sm:$0x1]
        %v973 = vadd.f32 %v812, %v815
        %v974 = vadd.f32 %v973, %v820
        %v975 = vadd.f32 %v974, %v823
        %v976 = vadd.f32 %v975, %v828
        %v977 = vadd.f32 %v976, %v831
        %v978 = vadd.f32 %v977, %v836
        %v979 = vadd.f32 %v978, %v839
        %v980 = vadd.f32 %v979, %v844
        %v981 = vadd.f32 %v980, %v847
        %v982 = vadd.f32 %v981, %v852
        %v983 = vadd.f32 %v982, %v855
        %v984 = vadd.f32 %v983, %v860
        %v985 = vadd.f32 %v984, %v863
        %v986 = vadd.f32 %v985, %v868
        %v987 = vadd.f32 %v986, %v871
        %v988 = vadd.f32 %v987, %v876
        %v989 = vadd.f32 %v988, %v879
        %v990 = vadd.f32 %v989, %v884
        %v991 = vadd.f32 %v990, %v887
        %v992 = vadd.f32 %v991, %v892
        %v993 = vadd.f32 %v992, %v895
        %v994 = vadd.f32 %v993, %v900
        %v995 = vadd.f32 %v994, %v903
        %v996 = vadd.f32 %v995, %v908
        %v997 = vadd.f32 %v996, %v911
        %v998 = vadd.f32 %v997, %v916
        %v999 = vadd.f32 %v998, %v919
        %v1000 = vadd.f32 %v999, %v924
        %v1001 = vadd.f32 %v1000, %v927
        %v1002 = vadd.f32 %v1001, %v932
        %v1003 = vadd.f32 %v1002, %v935
        %v1004 = vrot.slane %v1003, 4
        %v1005 = vadd.f32 %v1003, %v1004
        %v1006 = vrot.slane %v1005, 2
        %v1007 = vadd.f32 %v1005, %v1006
        %v1008 = vrot.slane %v1007, 1
        %v1009 = vadd.f32 %v1007, %v1008
        %v1010 = vadd.f32 %v972, %v1009
        %1011 = vst [vmem:[#allocation3] sm:$0x1] %v1010
        %v1012 = vld [vmem:[#allocation3 + $0x1] sm:$0x1]
        %v1013 = vmul.f32 %v812, %v812
        %v1014 = vmul.f32 %v815, %v815
        %v1015 = vmul.f32 %v820, %v820
        %v1016 = vmul.f32 %v823, %v823
        %v1017 = vmul.f32 %v828, %v828
        %v1018 = vmul.f32 %v831, %v831
        %v1019 = vmul.f32 %v836, %v836
        %v1020 = vmul.f32 %v839, %v839
        %v1021 = vmul.f32 %v844, %v844
        %v1022 = vmul.f32 %v847, %v847
        %v1023 = vmul.f32 %v852, %v852
        %v1024 = vmul.f32 %v855, %v855
        %v1025 = vmul.f32 %v860, %v860
        %v1026 = vmul.f32 %v863, %v863
        %v1027 = vmul.f32 %v868, %v868
        %v1028 = vmul.f32 %v871, %v871
        %v1029 = vmul.f32 %v876, %v876
        %v1030 = vmul.f32 %v879, %v879
        %v1031 = vmul.f32 %v884, %v884
        %v1032 = vmul.f32 %v887, %v887
        %v1033 = vmul.f32 %v892, %v892
        %v1034 = vmul.f32 %v895, %v895
        %v1035 = vmul.f32 %v900, %v900
        %v1036 = vmul.f32 %v903, %v903
        %v1037 = vmul.f32 %v908, %v908
        %v1038 = vmul.f32 %v911, %v911
        %v1039 = vmul.f32 %v916, %v916
        %v1040 = vmul.f32 %v919, %v919
        %v1041 = vmul.f32 %v924, %v924
        %v1042 = vmul.f32 %v927, %v927
        %v1043 = vmul.f32 %v932, %v932
        %v1044 = vmul.f32 %v935, %v935
        %v1045 = vadd.f32 %v1013, %v1014
        %v1046 = vadd.f32 %v1045, %v1015
        %v1047 = vadd.f32 %v1046, %v1016
        %v1048 = vadd.f32 %v1047, %v1017
        %v1049 = vadd.f32 %v1048, %v1018
        %v1050 = vadd.f32 %v1049, %v1019
        %v1051 = vadd.f32 %v1050, %v1020
        %v1052 = vadd.f32 %v1051, %v1021
        %v1053 = vadd.f32 %v1052, %v1022
        %v1054 = vadd.f32 %v1053, %v1023
        %v1055 = vadd.f32 %v1054, %v1024
        %v1056 = vadd.f32 %v1055, %v1025
        %v1057 = vadd.f32 %v1056, %v1026
        %v1058 = vadd.f32 %v1057, %v1027
        %v1059 = vadd.f32 %v1058, %v1028
        %v1060 = vadd.f32 %v1059, %v1029
        %v1061 = vadd.f32 %v1060, %v1030
        %v1062 = vadd.f32 %v1061, %v1031
        %v1063 = vadd.f32 %v1062, %v1032
        %v1064 = vadd.f32 %v1063, %v1033
        %v1065 = vadd.f32 %v1064, %v1034
        %v1066 = vadd.f32 %v1065, %v1035
        %v1067 = vadd.f32 %v1066, %v1036
        %v1068 = vadd.f32 %v1067, %v1037
        %v1069 = vadd.f32 %v1068, %v1038
        %v1070 = vadd.f32 %v1069, %v1039
        %v1071 = vadd.f32 %v1070, %v1040
        %v1072 = vadd.f32 %v1071, %v1041
        %v1073 = vadd.f32 %v1072, %v1042
        %v1074 = vadd.f32 %v1073, %v1043
        %v1075 = vadd.f32 %v1074, %v1044
        %v1076 = vrot.slane %v1075, 4
        %v1077 = vadd.f32 %v1075, %v1076
        %v1078 = vrot.slane %v1077, 2
        %v1079 = vadd.f32 %v1077, %v1078
        %v1080 = vrot.slane %v1079, 1
        %v1081 = vadd.f32 %v1079, %v1080
        %v1082 = vadd.f32 %v1012, %v1081
        %1083 = vst [vmem:[#allocation3 + $0x1] sm:$0x1] %v1082
        %p1084 = scmp.eq.s32.totalorder %s33, 1
        // Predicated region
        $region93: #{online_forward.1} parent=87 // pred_check
          %p1085 = pneg %p1084
        $region94: #{online_forward.1} parent=87 // pred_check_branch
          %1087 = sbr.rel (%p1085) target = $region96
        $region95: #{online_forward.1} parent=87 // pred_region
          %v1088 = vld [vmem:[#allocation3] sm:$0x1]
          %v1089 = vmul.f32 %v1088, 0.001953125
          %v1090 = vld [vmem:[#allocation3 + $0x1] sm:$0x1]
          %v1091 = vmul.f32 %v1090, 0.001953125
          %v1092 = vmul.f32 %v1089, %v1089
          %v1093 = vsub.f32 %v1091, %v1092
          %v1094 = vadd.f32 %v1093, 1e-05
          %v1095 = vrsqrt.pop %v1094
          %v1096 = vld [vmem:[%s3] sm:$0x1]
          %v1097 = vmul.f32 %v1095, %v1096
          %v1098 = vld [vmem:[%s4] sm:$0x1]
          %v1099 = vmul.f32 %v1089, %v1097
          %v1100 = vsub.f32 %v1098, %v1099
          %v1101 = vld [vmem:[#allocation2] sm:$0xff]
          %v1102 = vld [vmem:[#allocation2 + $0x8] sm:$0xff]
          %v1103 = vld [vmem:[#allocation2 + $0x10] sm:$0xff]
          %v1104 = vld [vmem:[#allocation2 + $0x18] sm:$0xff]
          %v1105 = vld [vmem:[#allocation2 + $0x20] sm:$0xff]
          %v1106 = vld [vmem:[#allocation2 + $0x28] sm:$0xff]
          %v1107 = vld [vmem:[#allocation2 + $0x30] sm:$0xff]
          %v1108 = vld [vmem:[#allocation2 + $0x38] sm:$0xff]
          %v1109 = vld [vmem:[#allocation2 + $0x40] sm:$0xff]
          %v1110 = vld [vmem:[#allocation2 + $0x48] sm:$0xff]
          %v1111 = vld [vmem:[#allocation2 + $0x50] sm:$0xff]
          %v1112 = vld [vmem:[#allocation2 + $0x58] sm:$0xff]
          %v1113 = vld [vmem:[#allocation2 + $0x60] sm:$0xff]
          %v1114 = vld [vmem:[#allocation2 + $0x68] sm:$0xff]
          %v1115 = vld [vmem:[#allocation2 + $0x70] sm:$0xff]
          %v1116 = vld [vmem:[#allocation2 + $0x78] sm:$0xff]
          %v1117 = vld [vmem:[#allocation2 + $0x80] sm:$0xff]
          %v1118 = vld [vmem:[#allocation2 + $0x88] sm:$0xff]
          %v1119 = vld [vmem:[#allocation2 + $0x90] sm:$0xff]
          %v1120 = vld [vmem:[#allocation2 + $0x98] sm:$0xff]
          %v1121 = vld [vmem:[#allocation2 + $0xa0] sm:$0xff]
          %v1122 = vld [vmem:[#allocation2 + $0xa8] sm:$0xff]
          %v1123 = vld [vmem:[#allocation2 + $0xb0] sm:$0xff]
          %v1124 = vld [vmem:[#allocation2 + $0xb8] sm:$0xff]
          %v1125 = vld [vmem:[#allocation2 + $0xc0] sm:$0xff]
          %v1126 = vld [vmem:[#allocation2 + $0xc8] sm:$0xff]
          %v1127 = vld [vmem:[#allocation2 + $0xd0] sm:$0xff]
          %v1128 = vld [vmem:[#allocation2 + $0xd8] sm:$0xff]
          %v1129 = vld [vmem:[#allocation2 + $0xe0] sm:$0xff]
          %v1130 = vld [vmem:[#allocation2 + $0xe8] sm:$0xff]
          %v1131 = vld [vmem:[#allocation2 + $0xf0] sm:$0xff]
          %v1132 = vld [vmem:[#allocation2 + $0xf8] sm:$0xff]
          %v1133 = vlaneseq
          %v1134 = vshrl.u32 %v1133, 7
          %v1135 = vsub.s32 0, %v1134
          %v1136 = vrot.slane %v1097, %v1135
          %v1137 = vmul.f32 %v1101, %v1136
          %v1138 = vmul.f32 %v1102, %v1136
          %v1139 = vmul.f32 %v1103, %v1136
          %v1140 = vmul.f32 %v1104, %v1136
          %v1141 = vmul.f32 %v1105, %v1136
          %v1142 = vmul.f32 %v1106, %v1136
          %v1143 = vmul.f32 %v1107, %v1136
          %v1144 = vmul.f32 %v1108, %v1136
          %v1145 = vmul.f32 %v1109, %v1136
          %v1146 = vmul.f32 %v1110, %v1136
          %v1147 = vmul.f32 %v1111, %v1136
          %v1148 = vmul.f32 %v1112, %v1136
          %v1149 = vmul.f32 %v1113, %v1136
          %v1150 = vmul.f32 %v1114, %v1136
          %v1151 = vmul.f32 %v1115, %v1136
          %v1152 = vmul.f32 %v1116, %v1136
          %v1153 = vmul.f32 %v1117, %v1136
          %v1154 = vmul.f32 %v1118, %v1136
          %v1155 = vmul.f32 %v1119, %v1136
          %v1156 = vmul.f32 %v1120, %v1136
          %v1157 = vmul.f32 %v1121, %v1136
          %v1158 = vmul.f32 %v1122, %v1136
          %v1159 = vmul.f32 %v1123, %v1136
          %v1160 = vmul.f32 %v1124, %v1136
          %v1161 = vmul.f32 %v1125, %v1136
          %v1162 = vmul.f32 %v1126, %v1136
          %v1163 = vmul.f32 %v1127, %v1136
          %v1164 = vmul.f32 %v1128, %v1136
          %v1165 = vmul.f32 %v1129, %v1136
          %v1166 = vmul.f32 %v1130, %v1136
          %v1167 = vmul.f32 %v1131, %v1136
          %v1168 = vmul.f32 %v1132, %v1136
          %v1170 = vlaneseq
          %v1171 = vshrl.u32 %v1170, 7
          %v1172 = vsub.s32 0, %v1171
          %v1173 = vrot.slane %v1100, %v1172
          %v1175 = vadd.f32 %v1137, %v1173
          %v1176 = vadd.f32 %v1138, %v1173
          %v1177 = vadd.f32 %v1139, %v1173
          %v1178 = vadd.f32 %v1140, %v1173
          %v1179 = vadd.f32 %v1141, %v1173
          %v1180 = vadd.f32 %v1142, %v1173
          %v1181 = vadd.f32 %v1143, %v1173
          %v1182 = vadd.f32 %v1144, %v1173
          %v1183 = vadd.f32 %v1145, %v1173
          %v1184 = vadd.f32 %v1146, %v1173
          %v1185 = vadd.f32 %v1147, %v1173
          %v1186 = vadd.f32 %v1148, %v1173
          %v1187 = vadd.f32 %v1149, %v1173
          %v1188 = vadd.f32 %v1150, %v1173
          %v1189 = vadd.f32 %v1151, %v1173
          %v1190 = vadd.f32 %v1152, %v1173
          %v1191 = vadd.f32 %v1153, %v1173
          %v1192 = vadd.f32 %v1154, %v1173
          %v1193 = vadd.f32 %v1155, %v1173
          %v1194 = vadd.f32 %v1156, %v1173
          %v1195 = vadd.f32 %v1157, %v1173
          %v1196 = vadd.f32 %v1158, %v1173
          %v1197 = vadd.f32 %v1159, %v1173
          %v1198 = vadd.f32 %v1160, %v1173
          %v1199 = vadd.f32 %v1161, %v1173
          %v1200 = vadd.f32 %v1162, %v1173
          %v1201 = vadd.f32 %v1163, %v1173
          %v1202 = vadd.f32 %v1164, %v1173
          %v1203 = vadd.f32 %v1165, %v1173
          %v1204 = vadd.f32 %v1166, %v1173
          %v1205 = vadd.f32 %v1167, %v1173
          %v1206 = vadd.f32 %v1168, %v1173
          %v1207 = vmax.f32 %v1175, 0.0
          %v1208 = vmax.f32 %v1176, 0.0
          %v1209 = vmax.f32 %v1177, 0.0
          %v1210 = vmax.f32 %v1178, 0.0
          %v1211 = vmax.f32 %v1179, 0.0
          %v1212 = vmax.f32 %v1180, 0.0
          %v1213 = vmax.f32 %v1181, 0.0
          %v1214 = vmax.f32 %v1182, 0.0
          %v1215 = vmax.f32 %v1183, 0.0
          %v1216 = vmax.f32 %v1184, 0.0
          %v1217 = vmax.f32 %v1185, 0.0
          %v1218 = vmax.f32 %v1186, 0.0
          %v1219 = vmax.f32 %v1187, 0.0
          %v1220 = vmax.f32 %v1188, 0.0
          %v1221 = vmax.f32 %v1189, 0.0
          %v1222 = vmax.f32 %v1190, 0.0
          %v1223 = vmax.f32 %v1191, 0.0
          %v1224 = vmax.f32 %v1192, 0.0
          %v1225 = vmax.f32 %v1193, 0.0
          %v1226 = vmax.f32 %v1194, 0.0
          %v1227 = vmax.f32 %v1195, 0.0
          %v1228 = vmax.f32 %v1196, 0.0
          %v1229 = vmax.f32 %v1197, 0.0
          %v1230 = vmax.f32 %v1198, 0.0
          %v1231 = vmax.f32 %v1199, 0.0
          %v1232 = vmax.f32 %v1200, 0.0
          %v1233 = vmax.f32 %v1201, 0.0
          %v1234 = vmax.f32 %v1202, 0.0
          %v1235 = vmax.f32 %v1203, 0.0
          %v1236 = vmax.f32 %v1204, 0.0
          %v1237 = vmax.f32 %v1205, 0.0
          %v1238 = vmax.f32 %v1206, 0.0
          %v1239 = vadd.f32 %v1207, %v1208
          %v1240 = vadd.f32 %v1239, %v1209
          %v1241 = vadd.f32 %v1240, %v1210
          %v1242 = vadd.f32 %v1241, %v1211
          %v1243 = vadd.f32 %v1242, %v1212
          %v1244 = vadd.f32 %v1243, %v1213
          %v1245 = vadd.f32 %v1244, %v1214
          %v1246 = vadd.f32 %v1245, %v1215
          %v1247 = vadd.f32 %v1246, %v1216
          %v1248 = vadd.f32 %v1247, %v1217
          %v1249 = vadd.f32 %v1248, %v1218
          %v1250 = vadd.f32 %v1249, %v1219
          %v1251 = vadd.f32 %v1250, %v1220
          %v1252 = vadd.f32 %v1251, %v1221
          %v1253 = vadd.f32 %v1252, %v1222
          %v1254 = vadd.f32 %v1253, %v1223
          %v1255 = vadd.f32 %v1254, %v1224
          %v1256 = vadd.f32 %v1255, %v1225
          %v1257 = vadd.f32 %v1256, %v1226
          %v1258 = vadd.f32 %v1257, %v1227
          %v1259 = vadd.f32 %v1258, %v1228
          %v1260 = vadd.f32 %v1259, %v1229
          %v1261 = vadd.f32 %v1260, %v1230
          %v1262 = vadd.f32 %v1261, %v1231
          %v1263 = vadd.f32 %v1262, %v1232
          %v1264 = vadd.f32 %v1263, %v1233
          %v1265 = vadd.f32 %v1264, %v1234
          %v1266 = vadd.f32 %v1265, %v1235
          %v1267 = vadd.f32 %v1266, %v1236
          %v1268 = vadd.f32 %v1267, %v1237
          %v1269 = vadd.f32 %v1268, %v1238
          %v1270 = vrot.slane %v1269, 4
          %v1271 = vadd.f32 %v1269, %v1270
          %v1272 = vrot.slane %v1271, 2
          %v1273 = vadd.f32 %v1271, %v1272
          %v1274 = vrot.slane %v1273, 1
          %v1275 = vadd.f32 %v1273, %v1274
          %v1276 = vmul.f32 %v1275, 0.00390625
          %1277 = vst [vmem:[#allocation4] sm:$0x1] %v1276
          %v1278 = vld [vmem:[#allocation2 + $0x100] sm:$0xff]
          %v1279 = vld [vmem:[#allocation2 + $0x108] sm:$0xff]
          %v1280 = vld [vmem:[#allocation2 + $0x110] sm:$0xff]
          %v1281 = vld [vmem:[#allocation2 + $0x118] sm:$0xff]
          %v1282 = vld [vmem:[#allocation2 + $0x120] sm:$0xff]
          %v1283 = vld [vmem:[#allocation2 + $0x128] sm:$0xff]
          %v1284 = vld [vmem:[#allocation2 + $0x130] sm:$0xff]
          %v1285 = vld [vmem:[#allocation2 + $0x138] sm:$0xff]
          %v1286 = vld [vmem:[#allocation2 + $0x140] sm:$0xff]
          %v1287 = vld [vmem:[#allocation2 + $0x148] sm:$0xff]
          %v1288 = vld [vmem:[#allocation2 + $0x150] sm:$0xff]
          %v1289 = vld [vmem:[#allocation2 + $0x158] sm:$0xff]
          %v1290 = vld [vmem:[#allocation2 + $0x160] sm:$0xff]
          %v1291 = vld [vmem:[#allocation2 + $0x168] sm:$0xff]
          %v1292 = vld [vmem:[#allocation2 + $0x170] sm:$0xff]
          %v1293 = vld [vmem:[#allocation2 + $0x178] sm:$0xff]
          %v1294 = vld [vmem:[#allocation2 + $0x180] sm:$0xff]
          %v1295 = vld [vmem:[#allocation2 + $0x188] sm:$0xff]
          %v1296 = vld [vmem:[#allocation2 + $0x190] sm:$0xff]
          %v1297 = vld [vmem:[#allocation2 + $0x198] sm:$0xff]
          %v1298 = vld [vmem:[#allocation2 + $0x1a0] sm:$0xff]
          %v1299 = vld [vmem:[#allocation2 + $0x1a8] sm:$0xff]
          %v1300 = vld [vmem:[#allocation2 + $0x1b0] sm:$0xff]
          %v1301 = vld [vmem:[#allocation2 + $0x1b8] sm:$0xff]
          %v1302 = vld [vmem:[#allocation2 + $0x1c0] sm:$0xff]
          %v1303 = vld [vmem:[#allocation2 + $0x1c8] sm:$0xff]
          %v1304 = vld [vmem:[#allocation2 + $0x1d0] sm:$0xff]
          %v1305 = vld [vmem:[#allocation2 + $0x1d8] sm:$0xff]
          %v1306 = vld [vmem:[#allocation2 + $0x1e0] sm:$0xff]
          %v1307 = vld [vmem:[#allocation2 + $0x1e8] sm:$0xff]
          %v1308 = vld [vmem:[#allocation2 + $0x1f0] sm:$0xff]
          %v1309 = vld [vmem:[#allocation2 + $0x1f8] sm:$0xff]
          %v1310 = vmul.f32 %v1278, %v1136
          %v1311 = vmul.f32 %v1279, %v1136
          %v1312 = vmul.f32 %v1280, %v1136
          %v1313 = vmul.f32 %v1281, %v1136
          %v1314 = vmul.f32 %v1282, %v1136
          %v1315 = vmul.f32 %v1283, %v1136
          %v1316 = vmul.f32 %v1284, %v1136
          %v1317 = vmul.f32 %v1285, %v1136
          %v1318 = vmul.f32 %v1286, %v1136
          %v1319 = vmul.f32 %v1287, %v1136
          %v1320 = vmul.f32 %v1288, %v1136
          %v1321 = vmul.f32 %v1289, %v1136
          %v1322 = vmul.f32 %v1290, %v1136
          %v1323 = vmul.f32 %v1291, %v1136
          %v1324 = vmul.f32 %v1292, %v1136
          %v1325 = vmul.f32 %v1293, %v1136
          %v1326 = vmul.f32 %v1294, %v1136
          %v1327 = vmul.f32 %v1295, %v1136
          %v1328 = vmul.f32 %v1296, %v1136
          %v1329 = vmul.f32 %v1297, %v1136
          %v1330 = vmul.f32 %v1298, %v1136
          %v1331 = vmul.f32 %v1299, %v1136
          %v1332 = vmul.f32 %v1300, %v1136
          %v1333 = vmul.f32 %v1301, %v1136
          %v1334 = vmul.f32 %v1302, %v1136
          %v1335 = vmul.f32 %v1303, %v1136
          %v1336 = vmul.f32 %v1304, %v1136
          %v1337 = vmul.f32 %v1305, %v1136
          %v1338 = vmul.f32 %v1306, %v1136
          %v1339 = vmul.f32 %v1307, %v1136
          %v1340 = vmul.f32 %v1308, %v1136
          %v1341 = vmul.f32 %v1309, %v1136
          %v1342 = vadd.f32 %v1310, %v1173
          %v1343 = vadd.f32 %v1311, %v1173
          %v1344 = vadd.f32 %v1312, %v1173
          %v1345 = vadd.f32 %v1313, %v1173
          %v1346 = vadd.f32 %v1314, %v1173
          %v1347 = vadd.f32 %v1315, %v1173
          %v1348 = vadd.f32 %v1316, %v1173
          %v1349 = vadd.f32 %v1317, %v1173
          %v1350 = vadd.f32 %v1318, %v1173
          %v1351 = vadd.f32 %v1319, %v1173
          %v1352 = vadd.f32 %v1320, %v1173
          %v1353 = vadd.f32 %v1321, %v1173
          %v1354 = vadd.f32 %v1322, %v1173
          %v1355 = vadd.f32 %v1323, %v1173
          %v1356 = vadd.f32 %v1324, %v1173
          %v1357 = vadd.f32 %v1325, %v1173
          %v1358 = vadd.f32 %v1326, %v1173
          %v1359 = vadd.f32 %v1327, %v1173
          %v1360 = vadd.f32 %v1328, %v1173
          %v1361 = vadd.f32 %v1329, %v1173
          %v1362 = vadd.f32 %v1330, %v1173
          %v1363 = vadd.f32 %v1331, %v1173
          %v1364 = vadd.f32 %v1332, %v1173
          %v1365 = vadd.f32 %v1333, %v1173
          %v1366 = vadd.f32 %v1334, %v1173
          %v1367 = vadd.f32 %v1335, %v1173
          %v1368 = vadd.f32 %v1336, %v1173
          %v1369 = vadd.f32 %v1337, %v1173
          %v1370 = vadd.f32 %v1338, %v1173
          %v1371 = vadd.f32 %v1339, %v1173
          %v1372 = vadd.f32 %v1340, %v1173
          %v1373 = vadd.f32 %v1341, %v1173
          %v1374 = vmax.f32 %v1342, 0.0
          %v1375 = vmax.f32 %v1343, 0.0
          %v1376 = vmax.f32 %v1344, 0.0
          %v1377 = vmax.f32 %v1345, 0.0
          %v1378 = vmax.f32 %v1346, 0.0
          %v1379 = vmax.f32 %v1347, 0.0
          %v1380 = vmax.f32 %v1348, 0.0
          %v1381 = vmax.f32 %v1349, 0.0
          %v1382 = vmax.f32 %v1350, 0.0
          %v1383 = vmax.f32 %v1351, 0.0
          %v1384 = vmax.f32 %v1352, 0.0
          %v1385 = vmax.f32 %v1353, 0.0
          %v1386 = vmax.f32 %v1354, 0.0
          %v1387 = vmax.f32 %v1355, 0.0
          %v1388 = vmax.f32 %v1356, 0.0
          %v1389 = vmax.f32 %v1357, 0.0
          %v1390 = vmax.f32 %v1358, 0.0
          %v1391 = vmax.f32 %v1359, 0.0
          %v1392 = vmax.f32 %v1360, 0.0
          %v1393 = vmax.f32 %v1361, 0.0
          %v1394 = vmax.f32 %v1362, 0.0
          %v1395 = vmax.f32 %v1363, 0.0
          %v1396 = vmax.f32 %v1364, 0.0
          %v1397 = vmax.f32 %v1365, 0.0
          %v1398 = vmax.f32 %v1366, 0.0
          %v1399 = vmax.f32 %v1367, 0.0
          %v1400 = vmax.f32 %v1368, 0.0
          %v1401 = vmax.f32 %v1369, 0.0
          %v1402 = vmax.f32 %v1370, 0.0
          %v1403 = vmax.f32 %v1371, 0.0
          %v1404 = vmax.f32 %v1372, 0.0
          %v1405 = vmax.f32 %v1373, 0.0
          %v1406 = vadd.f32 %v1374, %v1375
          %v1407 = vadd.f32 %v1406, %v1376
          %v1408 = vadd.f32 %v1407, %v1377
          %v1409 = vadd.f32 %v1408, %v1378
          %v1410 = vadd.f32 %v1409, %v1379
          %v1411 = vadd.f32 %v1410, %v1380
          %v1412 = vadd.f32 %v1411, %v1381
          %v1413 = vadd.f32 %v1412, %v1382
          %v1414 = vadd.f32 %v1413, %v1383
          %v1415 = vadd.f32 %v1414, %v1384
          %v1416 = vadd.f32 %v1415, %v1385
          %v1417 = vadd.f32 %v1416, %v1386
          %v1418 = vadd.f32 %v1417, %v1387
          %v1419 = vadd.f32 %v1418, %v1388
          %v1420 = vadd.f32 %v1419, %v1389
          %v1421 = vadd.f32 %v1420, %v1390
          %v1422 = vadd.f32 %v1421, %v1391
          %v1423 = vadd.f32 %v1422, %v1392
          %v1424 = vadd.f32 %v1423, %v1393
          %v1425 = vadd.f32 %v1424, %v1394
          %v1426 = vadd.f32 %v1425, %v1395
          %v1427 = vadd.f32 %v1426, %v1396
          %v1428 = vadd.f32 %v1427, %v1397
          %v1429 = vadd.f32 %v1428, %v1398
          %v1430 = vadd.f32 %v1429, %v1399
          %v1431 = vadd.f32 %v1430, %v1400
          %v1432 = vadd.f32 %v1431, %v1401
          %v1433 = vadd.f32 %v1432, %v1402
          %v1434 = vadd.f32 %v1433, %v1403
          %v1435 = vadd.f32 %v1434, %v1404
          %v1436 = vadd.f32 %v1435, %v1405
          %v1437 = vrot.slane %v1436, 4
          %v1438 = vadd.f32 %v1436, %v1437
          %v1439 = vrot.slane %v1438, 2
          %v1440 = vadd.f32 %v1438, %v1439
          %v1441 = vrot.slane %v1440, 1
          %v1442 = vadd.f32 %v1440, %v1441
          %v1443 = vmul.f32 %v1442, 0.00390625
          %1444 = vst [vmem:[#allocation4 + $0x1] sm:$0x1] %v1443
          %v1445 = vld [vmem:[#allocation4] sm:$0x3]
          %v1446 = vld [vmem:[%s5] sm:$0xff]
          %v1447 = vld [vmem:[%s5 + $0x8] sm:$0xff]
          %v1448 = vld [vmem:[%s5 + $0x10] sm:$0xff]
          %v1449 = vld [vmem:[%s5 + $0x18] sm:$0xff]
          %v1450 = vld [vmem:[%s5 + $0x20] sm:$0xff]
          %v1451 = vld [vmem:[%s5 + $0x28] sm:$0xff]
          %v1452 = vld [vmem:[%s5 + $0x30] sm:$0xff]
          %v1453 = vld [vmem:[%s5 + $0x38] sm:$0xff]
          %v1454 = vld [vmem:[%s5 + $0x40] sm:$0xff]
          %v1455 = vld [vmem:[%s5 + $0x48] sm:$0xff]
          %v1456 = vld [vmem:[%s5 + $0x50] sm:$0xff]
          %v1457 = vld [vmem:[%s5 + $0x58] sm:$0xff]
          %v1458 = vld [vmem:[%s5 + $0x60] sm:$0xff]
          %v1459 = vld [vmem:[%s5 + $0x68] sm:$0xff]
          %v1460 = vld [vmem:[%s5 + $0x70] sm:$0xff]
          %v1461 = vld [vmem:[%s5 + $0x78] sm:$0xff]
          %v1462 = vld [vmem:[%s6] sm:$0x1]
          %v1463 = vld [vmem:[%s7] sm:$0x1]
          %v1464 = vld [vmem:[%s8] sm:$0x1]
          %v1465 = vld [vmem:[%s9] sm:$0xff]
          %v1466 = vld [vmem:[%s9 + $0x8] sm:$0xff]
          %v1467 = vld [vmem:[%s9 + $0x10] sm:$0xff]
          %v1468 = vld [vmem:[%s9 + $0x18] sm:$0xff]
          %v1469 = vld [vmem:[%s9 + $0x20] sm:$0xff]
          %v1470 = vld [vmem:[%s9 + $0x28] sm:$0xff]
          %v1471 = vld [vmem:[%s9 + $0x30] sm:$0xff]
          %v1472 = vld [vmem:[%s9 + $0x38] sm:$0xff]
          %v1473 = vld [vmem:[%s9 + $0x40] sm:$0xff]
          %v1474 = vld [vmem:[%s9 + $0x48] sm:$0xff]
          %v1475 = vld [vmem:[%s9 + $0x50] sm:$0xff]
          %v1476 = vld [vmem:[%s9 + $0x58] sm:$0xff]
          %v1477 = vld [vmem:[%s9 + $0x60] sm:$0xff]
          %v1478 = vld [vmem:[%s9 + $0x68] sm:$0xff]
          %v1479 = vld [vmem:[%s9 + $0x70] sm:$0xff]
          %v1480 = vld [vmem:[%s9 + $0x78] sm:$0xff]
          %v1481 = vld [vmem:[%s10] sm:$0x1]
          %v1483 = vlaneseq
          %v1484 = vshrl.u32 %v1483, 7
          %v1485 = vsub.s32 0, %v1484
          %v1486 = vrot.slane %v1462, %v1485
          %1488 = vmatprep.subr.mxu0 0.0
          %1489 = vmatpush1.msra.mxu0 %v1446
          %1490 = vmatprep.subr.mxu0 0.0
          %1491 = vmatpush1.msra.mxu0 %v1447
          %1492 = vmatprep.subr.mxu0 0.0
          %1493 = vmatpush1.msra.mxu0 %v1448
          %1494 = vmatprep.subr.mxu0 0.0
          %1495 = vmatpush1.msra.mxu0 %v1449
          %1496 = vmatprep.subr.mxu0 0.0
          %1497 = vmatpush1.msra.mxu0 %v1450
          %1498 = vmatprep.subr.mxu0 0.0
          %1499 = vmatpush1.msra.mxu0 %v1451
          %1500 = vmatprep.subr.mxu0 0.0
          %1501 = vmatpush1.msra.mxu0 %v1452
          %1502 = vmatprep.subr.mxu0 0.0
          %1503 = vmatpush1.msra.mxu0 %v1453
          %1504 = vmatprep.subr.mxu0 0.0
          %1505 = vmatpush1.msra.mxu0 %v1454
          %1506 = vmatprep.subr.mxu0 0.0
          %1507 = vmatpush1.msra.mxu0 %v1455
          %1508 = vmatprep.subr.mxu0 0.0
          %1509 = vmatpush1.msra.mxu0 %v1456
          %1510 = vmatprep.subr.mxu0 0.0
          %1511 = vmatpush1.msra.mxu0 %v1457
          %1512 = vmatprep.subr.mxu0 0.0
          %1513 = vmatpush1.msra.mxu0 %v1458
          %1514 = vmatprep.subr.mxu0 0.0
          %1515 = vmatpush1.msra.mxu0 %v1459
          %1516 = vmatprep.subr.mxu0 0.0
          %1517 = vmatpush1.msra.mxu0 %v1460
          %1518 = vmatprep.subr.mxu0 0.0
          %1519 = vmatpush1.msra.mxu0 %v1461
          %1520 = vmatprep.subr.mxu0 0.0
          %1521 = vmatpush1.msra.mxu0 0.0
          %1522 = vmatprep.subr.mxu0 0.0
          %1523 = vmatpush1.msra.mxu0 0.0
          %1524 = vmatprep.subr.mxu0 0.0
          %1525 = vmatpush1.msra.mxu0 0.0
          %1526 = vmatprep.subr.mxu0 0.0
          %1527 = vmatpush1.msra.mxu0 0.0
          %1528 = vmatprep.subr.mxu0 0.0
          %1529 = vmatpush1.msra.mxu0 0.0
          %1530 = vmatprep.subr.mxu0 0.0
          %1531 = vmatpush1.msra.mxu0 0.0
          %1532 = vmatprep.subr.mxu0 0.0
          %1533 = vmatpush1.msra.mxu0 0.0
          %1534 = vmatprep.subr.mxu0 0.0
          %1535 = vmatpush1.msra.mxu0 0.0
          %1536 = vmatprep.subr.mxu0 0.0
          %1537 = vmatpush1.msra.mxu0 0.0
          %1538 = vmatprep.subr.mxu0 0.0
          %1539 = vmatpush1.msra.mxu0 0.0
          %1540 = vmatprep.subr.mxu0 0.0
          %1541 = vmatpush1.msra.mxu0 0.0
          %1542 = vmatprep.subr.mxu0 0.0
          %1543 = vmatpush1.msra.mxu0 0.0
          %1544 = vmatprep.subr.mxu0 0.0
          %1545 = vmatpush1.msra.mxu0 0.0
          %1546 = vmatprep.subr.mxu0 0.0
          %1547 = vmatpush1.msra.mxu0 0.0
          %1548 = vmatprep.subr.mxu0 0.0
          %1549 = vmatpush1.msra.mxu0 0.0
          %1550 = vmatprep.subr.mxu0 0.0
          %1551 = vmatpush1.msra.mxu0 0.0
          %1552 = vmatprep.mubr.f32.mxu0 0.0
          %1553 = vmatmul.mubr.f32.gmra.mrb[0].mxu0 %v1445
          %v1554 = vpop.f32.mrb[0].mxu0
          %v1555 = vadd.f32 %v1486, %v1554
          %v1556 = vpop.f32.mrb[0].mxu0
          %1557 = vdwg.mxu0
          %vm1558 = vcmask 1041408
          %v1559 = vsel %vm1558, %v1555, 0.0
          %v1560 = vrot.slane %v1559, 4
          %v1561 = vadd.f32 %v1559, %v1560
          %v1562 = vrot.slane %v1561, 2
          %v1563 = vadd.f32 %v1561, %v1562
          %v1564 = vrot.slane %v1563, 1
          %v1565 = vadd.f32 %v1563, %v1564
          %v1566 = vrcp.pop 2.0
          %v1567 = vmul.f32 %v1565, %v1566
          %v1568 = vmul.f32 %v1555, %v1555
          %v1569 = vsel %vm1558, %v1568, 0.0
          %v1570 = vrot.slane %v1569, 4
          %v1571 = vadd.f32 %v1569, %v1570
          %v1572 = vrot.slane %v1571, 2
          %v1573 = vadd.f32 %v1571, %v1572
          %v1574 = vrot.slane %v1573, 1
          %v1575 = vadd.f32 %v1573, %v1574
          %v1576 = vmul.f32 %v1575, %v1566
          %v1577 = vmul.f32 %v1567, %v1567
          %v1578 = vsub.f32 %v1576, %v1577
          %v1579 = vsub.f32 %v1555, %v1567
          %v1580 = vadd.f32 %v1578, 1e-05
          %v1581 = vrsqrt.pop %v1580
          %v1582 = vmul.f32 %v1579, %v1581
          %v1584 = vlaneseq
          %v1585 = vshrl.u32 %v1584, 7
          %v1586 = vsub.s32 0, %v1585
          %v1587 = vrot.slane %v1463, %v1586
          %v1589 = vmul.f32 %v1582, %v1587
          %v1591 = vlaneseq
          %v1592 = vshrl.u32 %v1591, 7
          %v1593 = vsub.s32 0, %v1592
          %v1594 = vrot.slane %v1464, %v1593
          %v1596 = vadd.f32 %v1589, %v1594
          %v1597 = vmax.f32 %v1596, 0.0
          %v1599 = vlaneseq
          %v1600 = vshrl.u32 %v1599, 7
          %v1601 = vsub.s32 0, %v1600
          %v1602 = vrot.slane %v1481, %v1601
          %1604 = vmatprep.subr.mxu0 0.0
          %1605 = vmatpush1.msra.mxu0 %v1465
          %1606 = vmatprep.subr.mxu0 0.0
          %1607 = vmatpush1.msra.mxu0 %v1466
          %1608 = vmatprep.subr.mxu0 0.0
          %1609 = vmatpush1.msra.mxu0 %v1467
          %1610 = vmatprep.subr.mxu0 0.0
          %1611 = vmatpush1.msra.mxu0 %v1468
          %1612 = vmatprep.subr.mxu0 0.0
          %1613 = vmatpush1.msra.mxu0 %v1469
          %1614 = vmatprep.subr.mxu0 0.0
          %1615 = vmatpush1.msra.mxu0 %v1470
          %1616 = vmatprep.subr.mxu0 0.0
          %1617 = vmatpush1.msra.mxu0 %v1471
          %1618 = vmatprep.subr.mxu0 0.0
          %1619 = vmatpush1.msra.mxu0 %v1472
          %1620 = vmatprep.subr.mxu0 0.0
          %1621 = vmatpush1.msra.mxu0 %v1473
          %1622 = vmatprep.subr.mxu0 0.0
          %1623 = vmatpush1.msra.mxu0 %v1474
          %1624 = vmatprep.subr.mxu0 0.0
          %1625 = vmatpush1.msra.mxu0 %v1475
          %1626 = vmatprep.subr.mxu0 0.0
          %1627 = vmatpush1.msra.mxu0 %v1476
          %1628 = vmatprep.subr.mxu0 0.0
          %1629 = vmatpush1.msra.mxu0 %v1477
          %1630 = vmatprep.subr.mxu0 0.0
          %1631 = vmatpush1.msra.mxu0 %v1478
          %1632 = vmatprep.subr.mxu0 0.0
          %1633 = vmatpush1.msra.mxu0 %v1479
          %1634 = vmatprep.subr.mxu0 0.0
          %1635 = vmatpush1.msra.mxu0 %v1480
          %1636 = vmatprep.subr.mxu0 0.0
          %1637 = vmatpush1.msra.mxu0 0.0
          %1638 = vmatprep.subr.mxu0 0.0
          %1639 = vmatpush1.msra.mxu0 0.0
          %1640 = vmatprep.subr.mxu0 0.0
          %1641 = vmatpush1.msra.mxu0 0.0
          %1642 = vmatprep.subr.mxu0 0.0
          %1643 = vmatpush1.msra.mxu0 0.0
          %1644 = vmatprep.subr.mxu0 0.0
          %1645 = vmatpush1.msra.mxu0 0.0
          %1646 = vmatprep.subr.mxu0 0.0
          %1647 = vmatpush1.msra.mxu0 0.0
          %1648 = vmatprep.subr.mxu0 0.0
          %1649 = vmatpush1.msra.mxu0 0.0
          %1650 = vmatprep.subr.mxu0 0.0
          %1651 = vmatpush1.msra.mxu0 0.0
          %1652 = vmatprep.subr.mxu0 0.0
          %1653 = vmatpush1.msra.mxu0 0.0
          %1654 = vmatprep.subr.mxu0 0.0
          %1655 = vmatpush1.msra.mxu0 0.0
          %1656 = vmatprep.subr.mxu0 0.0
          %1657 = vmatpush1.msra.mxu0 0.0
          %1658 = vmatprep.subr.mxu0 0.0
          %1659 = vmatpush1.msra.mxu0 0.0
          %1660 = vmatprep.subr.mxu0 0.0
          %1661 = vmatpush1.msra.mxu0 0.0
          %1662 = vmatprep.subr.mxu0 0.0
          %1663 = vmatpush1.msra.mxu0 0.0
          %1664 = vmatprep.subr.mxu0 0.0
          %1665 = vmatpush1.msra.mxu0 0.0
          %1666 = vmatprep.subr.mxu0 0.0
          %1667 = vmatpush1.msra.mxu0 0.0
          %1668 = vmatprep.mubr.f32.mxu0 0.0
          %1669 = vmatmul.mubr.f32.gmra.mrb[0].mxu0 %v1597
          %v1670 = vpop.f32.mrb[0].mxu0
          %v1671 = vadd.f32 %v1602, %v1670
          %v1672 = vpop.f32.mrb[0].mxu0
          %1673 = vdwg.mxu0
          %1674 = vst [vmem:[#allocation6] sm:$0x3] %v1671
          %v1675 = vld [vmem:[%s11] sm:$0xff]
          %v1676 = vld [vmem:[%s11 + $0x8] sm:$0xff]
          %v1677 = vld [vmem:[%s11 + $0x10] sm:$0xff]
          %v1678 = vld [vmem:[%s11 + $0x18] sm:$0xff]
          %v1679 = vld [vmem:[%s11 + $0x20] sm:$0xff]
          %v1680 = vld [vmem:[%s11 + $0x28] sm:$0xff]
          %v1681 = vld [vmem:[%s11 + $0x30] sm:$0xff]
          %v1682 = vld [vmem:[%s11 + $0x38] sm:$0xff]
          %v1683 = vld [vmem:[%s11 + $0x40] sm:$0xff]
          %v1684 = vld [vmem:[%s11 + $0x48] sm:$0xff]
          %v1685 = vld [vmem:[%s11 + $0x50] sm:$0xff]
          %v1686 = vld [vmem:[%s11 + $0x58] sm:$0xff]
          %v1687 = vld [vmem:[%s11 + $0x60] sm:$0xff]
          %v1688 = vld [vmem:[%s11 + $0x68] sm:$0xff]
          %v1689 = vld [vmem:[%s11 + $0x70] sm:$0xff]
          %v1690 = vld [vmem:[%s11 + $0x78] sm:$0xff]
          %v1691 = vld [vmem:[%s12] sm:$0x1]
          %v1692 = vld [vmem:[%s13] sm:$0x1]
          %v1693 = vld [vmem:[%s14] sm:$0x1]
          %v1694 = vld [vmem:[%s15] sm:$0xff]
          %v1695 = vld [vmem:[%s15 + $0x8] sm:$0xff]
          %v1696 = vld [vmem:[%s15 + $0x10] sm:$0xff]
          %v1697 = vld [vmem:[%s15 + $0x18] sm:$0xff]
          %v1698 = vld [vmem:[%s15 + $0x20] sm:$0xff]
          %v1699 = vld [vmem:[%s15 + $0x28] sm:$0xff]
          %v1700 = vld [vmem:[%s15 + $0x30] sm:$0xff]
          %v1701 = vld [vmem:[%s15 + $0x38] sm:$0xff]
          %v1702 = vld [vmem:[%s15 + $0x40] sm:$0xff]
          %v1703 = vld [vmem:[%s15 + $0x48] sm:$0xff]
          %v1704 = vld [vmem:[%s15 + $0x50] sm:$0xff]
          %v1705 = vld [vmem:[%s15 + $0x58] sm:$0xff]
          %v1706 = vld [vmem:[%s15 + $0x60] sm:$0xff]
          %v1707 = vld [vmem:[%s15 + $0x68] sm:$0xff]
          %v1708 = vld [vmem:[%s15 + $0x70] sm:$0xff]
          %v1709 = vld [vmem:[%s15 + $0x78] sm:$0xff]
          %v1710 = vld [vmem:[%s16] sm:$0x1]
          %v1712 = vlaneseq
          %v1713 = vshrl.u32 %v1712, 7
          %v1714 = vsub.s32 0, %v1713
          %v1715 = vrot.slane %v1691, %v1714
          %1717 = vmatprep.subr.mxu0 0.0
          %1718 = vmatpush1.msra.mxu0 %v1675
          %1719 = vmatprep.subr.mxu0 0.0
          %1720 = vmatpush1.msra.mxu0 %v1676
          %1721 = vmatprep.subr.mxu0 0.0
          %1722 = vmatpush1.msra.mxu0 %v1677
          %1723 = vmatprep.subr.mxu0 0.0
          %1724 = vmatpush1.msra.mxu0 %v1678
          %1725 = vmatprep.subr.mxu0 0.0
          %1726 = vmatpush1.msra.mxu0 %v1679
          %1727 = vmatprep.subr.mxu0 0.0
          %1728 = vmatpush1.msra.mxu0 %v1680
          %1729 = vmatprep.subr.mxu0 0.0
          %1730 = vmatpush1.msra.mxu0 %v1681
          %1731 = vmatprep.subr.mxu0 0.0
          %1732 = vmatpush1.msra.mxu0 %v1682
          %1733 = vmatprep.subr.mxu0 0.0
          %1734 = vmatpush1.msra.mxu0 %v1683
          %1735 = vmatprep.subr.mxu0 0.0
          %1736 = vmatpush1.msra.mxu0 %v1684
          %1737 = vmatprep.subr.mxu0 0.0
          %1738 = vmatpush1.msra.mxu0 %v1685
          %1739 = vmatprep.subr.mxu0 0.0
          %1740 = vmatpush1.msra.mxu0 %v1686
          %1741 = vmatprep.subr.mxu0 0.0
          %1742 = vmatpush1.msra.mxu0 %v1687
          %1743 = vmatprep.subr.mxu0 0.0
          %1744 = vmatpush1.msra.mxu0 %v1688
          %1745 = vmatprep.subr.mxu0 0.0
          %1746 = vmatpush1.msra.mxu0 %v1689
          %1747 = vmatprep.subr.mxu0 0.0
          %1748 = vmatpush1.msra.mxu0 %v1690
          %1749 = vmatprep.subr.mxu0 0.0
          %1750 = vmatpush1.msra.mxu0 0.0
          %1751 = vmatprep.subr.mxu0 0.0
          %1752 = vmatpush1.msra.mxu0 0.0
          %1753 = vmatprep.subr.mxu0 0.0
          %1754 = vmatpush1.msra.mxu0 0.0
          %1755 = vmatprep.subr.mxu0 0.0
          %1756 = vmatpush1.msra.mxu0 0.0
          %1757 = vmatprep.subr.mxu0 0.0
          %1758 = vmatpush1.msra.mxu0 0.0
          %1759 = vmatprep.subr.mxu0 0.0
          %1760 = vmatpush1.msra.mxu0 0.0
          %1761 = vmatprep.subr.mxu0 0.0
          %1762 = vmatpush1.msra.mxu0 0.0
          %1763 = vmatprep.subr.mxu0 0.0
          %1764 = vmatpush1.msra.mxu0 0.0
          %1765 = vmatprep.subr.mxu0 0.0
          %1766 = vmatpush1.msra.mxu0 0.0
          %1767 = vmatprep.subr.mxu0 0.0
          %1768 = vmatpush1.msra.mxu0 0.0
          %1769 = vmatprep.subr.mxu0 0.0
          %1770 = vmatpush1.msra.mxu0 0.0
          %1771 = vmatprep.subr.mxu0 0.0
          %1772 = vmatpush1.msra.mxu0 0.0
          %1773 = vmatprep.subr.mxu0 0.0
          %1774 = vmatpush1.msra.mxu0 0.0
          %1775 = vmatprep.subr.mxu0 0.0
          %1776 = vmatpush1.msra.mxu0 0.0
          %1777 = vmatprep.subr.mxu0 0.0
          %1778 = vmatpush1.msra.mxu0 0.0
          %1779 = vmatprep.subr.mxu0 0.0
          %1780 = vmatpush1.msra.mxu0 0.0
          %1781 = vmatprep.mubr.f32.mxu0 0.0
          %1782 = vmatmul.mubr.f32.gmra.mrb[0].mxu0 %v1671
          %v1783 = vpop.f32.mrb[0].mxu0
          %v1784 = vadd.f32 %v1715, %v1783
          %v1785 = vpop.f32.mrb[0].mxu0
          %1786 = vdwg.mxu0
          %v1787 = vsel %vm1558, %v1784, 0.0
          %v1788 = vrot.slane %v1787, 4
          %v1789 = vadd.f32 %v1787, %v1788
          %v1790 = vrot.slane %v1789, 2
          %v1791 = vadd.f32 %v1789, %v1790
          %v1792 = vrot.slane %v1791, 1
          %v1793 = vadd.f32 %v1791, %v1792
          %v1794 = vmul.f32 %v1793, %v1566
          %v1795 = vmul.f32 %v1784, %v1784
          %v1796 = vsel %vm1558, %v1795, 0.0
          %v1797 = vrot.slane %v1796, 4
          %v1798 = vadd.f32 %v1796, %v1797
          %v1799 = vrot.slane %v1798, 2
          %v1800 = vadd.f32 %v1798, %v1799
          %v1801 = vrot.slane %v1800, 1
          %v1802 = vadd.f32 %v1800, %v1801
          %v1803 = vmul.f32 %v1802, %v1566
          %v1804 = vmul.f32 %v1794, %v1794
          %v1805 = vsub.f32 %v1803, %v1804
          %v1806 = vsub.f32 %v1784, %v1794
          %v1807 = vadd.f32 %v1805, 1e-05
          %v1808 = vrsqrt.pop %v1807
          %v1809 = vmul.f32 %v1806, %v1808
          %v1811 = vlaneseq
          %v1812 = vshrl.u32 %v1811, 7
          %v1813 = vsub.s32 0, %v1812
          %v1814 = vrot.slane %v1692, %v1813
          %v1816 = vmul.f32 %v1809, %v1814
          %v1818 = vlaneseq
          %v1819 = vshrl.u32 %v1818, 7
          %v1820 = vsub.s32 0, %v1819
          %v1821 = vrot.slane %v1693, %v1820
          %v1823 = vadd.f32 %v1816, %v1821
          %v1824 = vmax.f32 %v1823, 0.0
          %v1826 = vlaneseq
          %v1827 = vshrl.u32 %v1826, 7
          %v1828 = vsub.s32 0, %v1827
          %v1829 = vrot.slane %v1710, %v1828
          %1831 = vmatprep.subr.mxu0 0.0
          %1832 = vmatpush1.msra.mxu0 %v1694
          %1833 = vmatprep.subr.mxu0 0.0
          %1834 = vmatpush1.msra.mxu0 %v1695
          %1835 = vmatprep.subr.mxu0 0.0
          %1836 = vmatpush1.msra.mxu0 %v1696
          %1837 = vmatprep.subr.mxu0 0.0
          %1838 = vmatpush1.msra.mxu0 %v1697
          %1839 = vmatprep.subr.mxu0 0.0
          %1840 = vmatpush1.msra.mxu0 %v1698
          %1841 = vmatprep.subr.mxu0 0.0
          %1842 = vmatpush1.msra.mxu0 %v1699
          %1843 = vmatprep.subr.mxu0 0.0
          %1844 = vmatpush1.msra.mxu0 %v1700
          %1845 = vmatprep.subr.mxu0 0.0
          %1846 = vmatpush1.msra.mxu0 %v1701
          %1847 = vmatprep.subr.mxu0 0.0
          %1848 = vmatpush1.msra.mxu0 %v1702
          %1849 = vmatprep.subr.mxu0 0.0
          %1850 = vmatpush1.msra.mxu0 %v1703
          %1851 = vmatprep.subr.mxu0 0.0
          %1852 = vmatpush1.msra.mxu0 %v1704
          %1853 = vmatprep.subr.mxu0 0.0
          %1854 = vmatpush1.msra.mxu0 %v1705
          %1855 = vmatprep.subr.mxu0 0.0
          %1856 = vmatpush1.msra.mxu0 %v1706
          %1857 = vmatprep.subr.mxu0 0.0
          %1858 = vmatpush1.msra.mxu0 %v1707
          %1859 = vmatprep.subr.mxu0 0.0
          %1860 = vmatpush1.msra.mxu0 %v1708
          %1861 = vmatprep.subr.mxu0 0.0
          %1862 = vmatpush1.msra.mxu0 %v1709
          %1863 = vmatprep.subr.mxu0 0.0
          %1864 = vmatpush1.msra.mxu0 0.0
          %1865 = vmatprep.subr.mxu0 0.0
          %1866 = vmatpush1.msra.mxu0 0.0
          %1867 = vmatprep.subr.mxu0 0.0
          %1868 = vmatpush1.msra.mxu0 0.0
          %1869 = vmatprep.subr.mxu0 0.0
          %1870 = vmatpush1.msra.mxu0 0.0
          %1871 = vmatprep.subr.mxu0 0.0
          %1872 = vmatpush1.msra.mxu0 0.0
          %1873 = vmatprep.subr.mxu0 0.0
          %1874 = vmatpush1.msra.mxu0 0.0
          %1875 = vmatprep.subr.mxu0 0.0
          %1876 = vmatpush1.msra.mxu0 0.0
          %1877 = vmatprep.subr.mxu0 0.0
          %1878 = vmatpush1.msra.mxu0 0.0
          %1879 = vmatprep.subr.mxu0 0.0
          %1880 = vmatpush1.msra.mxu0 0.0
          %1881 = vmatprep.subr.mxu0 0.0
          %1882 = vmatpush1.msra.mxu0 0.0
          %1883 = vmatprep.subr.mxu0 0.0
          %1884 = vmatpush1.msra.mxu0 0.0
          %1885 = vmatprep.subr.mxu0 0.0
          %1886 = vmatpush1.msra.mxu0 0.0
          %1887 = vmatprep.subr.mxu0 0.0
          %1888 = vmatpush1.msra.mxu0 0.0
          %1889 = vmatprep.subr.mxu0 0.0
          %1890 = vmatpush1.msra.mxu0 0.0
          %1891 = vmatprep.subr.mxu0 0.0
          %1892 = vmatpush1.msra.mxu0 0.0
          %1893 = vmatprep.subr.mxu0 0.0
          %1894 = vmatpush1.msra.mxu0 0.0
          %1895 = vmatprep.mubr.f32.mxu0 0.0
          %1896 = vmatmul.mubr.f32.gmra.mrb[0].mxu0 %v1824
          %v1897 = vpop.f32.mrb[0].mxu0
          %v1898 = vadd.f32 %v1829, %v1897
          %v1899 = vpop.f32.mrb[0].mxu0
          %1900 = vdwg.mxu0
          %1901 = vst [vmem:[#allocation8] sm:$0x3] %v1898
        $region96: #{online_forward.1} parent=87 // pred_fallthru
          _
        // Predicated region
        $region97: #{online_forward.1} parent=87 // pred_check
          %p1902 = pneg %p408
        $region98: #{online_forward.1} parent=87 // pred_check_branch
          %1904 = sbr.rel (%p1902) target = $region100
        $region99: #{online_forward.1} parent=87 // pred_region
          %s1906 = ssub.s32 32, 32
          %1907 = vsyncadd [#allocation5], %s1906
          %s1909 = sshll.u32 [#allocation4], 4
          %s1910 = int_to_ptr.vmem [resolvable:$true] %s1909
          %1912 = dma.vmem_to_hbm [thread:$0]  %s1910, 32, %s17, [#allocation5]
        $region100: #{online_forward.1} parent=87 // pred_fallthru
          _
        // Predicated region
        $region101: #{online_forward.1} parent=87 // pred_check
          %p1913 = pneg %p429
        $region102: #{online_forward.1} parent=87 // pred_check_branch
          %1915 = sbr.rel (%p1913) target = $region104
        $region103: #{online_forward.1} parent=87 // pred_region
          %s1917 = ssub.s32 32, 32
          %1918 = vsyncadd [#allocation7], %s1917
          %s1920 = sshll.u32 [#allocation6], 4
          %s1921 = int_to_ptr.vmem [resolvable:$true] %s1920
          %1923 = dma.vmem_to_hbm [thread:$0]  %s1921, 32, %s18, [#allocation7]
        $region104: #{online_forward.1} parent=87 // pred_fallthru
          _
        // Predicated region
        $region105: #{online_forward.1} parent=87 // pred_check
          %p1924 = pneg %p450
        $region106: #{online_forward.1} parent=87 // pred_check_branch
          %1926 = sbr.rel (%p1924) target = $region108
        $region107: #{online_forward.1} parent=87 // pred_region
          %s1928 = ssub.s32 32, 32
          %1929 = vsyncadd [#allocation7], %s1928
          %s1931 = sshll.u32 [#allocation8], 4
          %s1932 = int_to_ptr.vmem [resolvable:$true] %s1931
          %1934 = dma.vmem_to_hbm [thread:$0]  %s1932, 32, %s19, [#allocation7]
        $region108: #{online_forward.1} parent=87 // pred_fallthru
          _
        // Predicated region
        $region109: #{online_forward.1} parent=87 // pred_check
          %p1935 = pneg %p408
        $region110: #{online_forward.1} parent=87 // pred_check_branch
          %1937 = sbr.rel (%p1935) target = $region112
        $region111: #{online_forward.1} parent=87 // pred_region
          %1938 = dma.done [#allocation5], 32
        $region112: #{online_forward.1} parent=87 // pred_fallthru
          _
        // Predicated region
        $region113: #{online_forward.1} parent=87 // pred_check
          %p1939 = pneg %p429
        $region114: #{online_forward.1} parent=87 // pred_check_branch
          %1941 = sbr.rel (%p1939) target = $region116
        $region115: #{online_forward.1} parent=87 // pred_region
          %1942 = dma.done [#allocation7], 32
        $region116: #{online_forward.1} parent=87 // pred_fallthru
          _
        // Predicated region
        $region117: #{online_forward.1} parent=87 // pred_check
          %p1943 = pneg %p450
        $region118: #{online_forward.1} parent=87 // pred_check_branch
          %1945 = sbr.rel (%p1943) target = $region120
        $region119: #{online_forward.1} parent=87 // pred_region
          %1946 = dma.done [#allocation7], 32
        $region120: #{online_forward.1} parent=87 // pred_fallthru
          _
      $region88: #{online_forward.1} parent=5 // pred_fallthru
        _
      %p1947 = scmp.le.s32.totalorder 2, %s28
      // Predicated region
      $region121: #{online_forward.1} parent=5 // pred_check
        %p1948 = pneg %p1947
      $region122: #{online_forward.1} parent=5 // pred_check_branch
        %1950 = sbr.rel (%p1948) target = $region124
      $region123: #{online_forward.1} parent=5 // pred_region
        %s1951 = ssub.s32 %s28, 2
      $region124: #{online_forward.1} parent=5 // pred_fallthru
        _
    $region6: #{online_forward.1} parent=1 // loop_footer
      %s32 = sadd.s32 1, %s28
    $region7: #{online_forward.1} parent=1 // loop_footer_branch
      %27 = sbr.rel target = $region3
    $region8: #{online_forward.1} parent=1 // loop_exit
      _
    %1952 = vsyncpa [#allocation5], 1
    %s1953 = scalar_lea.sflag [#allocation5], 1
    %1954 = vsyncpa %s1953, 1
    %1955 = vsyncpa [#allocation7], 1

</llo_original>
